<compile_context>
chip_gen: v6e
topology: v6e:2x2x1
jax: 0.10.0
libtpu: 0.0.40
codegen_flags: <defaults>
</compile_context>

<pallas_src>
import functools
import math

import jax
import jax.numpy as jnp
from jax.experimental import pallas as pl
from jax.experimental.pallas import tpu as pltpu

LRELU_SLOPE = 0.2
LRELU_GAIN = math.sqrt(2.0)

LATENT_DIM = 32
CHANNELS = 16
BASE_RES = 4            # const input is 4x4, output image is 8x8

# merged style-affine column layout — every segment starts on a 128-lane
# boundary so the in-kernel slices are free.
_A_S0T = 0      # s0 tiled 3*W0 times (192 lanes)  -> modulates const_cat
_A_S1T = 256    # s1 tiled W0 times   (64 lanes)   -> modulates y0
_A_SRGB = 384   # srgb tiled W1 times (128 lanes)  -> modulates y1
_A_S0R = 512    # raw s0 (16 lanes)                -> demod d0
_A_S1R = 640    # raw s1 (16 lanes)                -> demod d1
_A_W = 656


def _lrelu(x):
    return jnp.where(x >= 0.0, x, LRELU_SLOPE * x) * LRELU_GAIN


# ----------------------------------------------------------------------------
# The single fused Pallas kernel (one grid step = one batch block)
# ----------------------------------------------------------------------------
def _generator_kernel(z_ref, fc1_w_ref, fc1_b_ref, fc2_w_ref, fc2_b_ref,
                      aff_w_ref, aff_b_ref, wsq0_ref, wsq1_ref, b0_ref, b1_ref,
                      const_cat_ref, w0_ref, w1_ref, wrgb_ref, brgb_ref,
                      e0_ref, e1_ref, r1_ref, csel_ref, o_ref, *, bb):
    C = CHANNELS
    W0 = BASE_RES
    H1 = W1 = 2 * BASE_RES
    m0 = (BASE_RES + 2) * bb - 2          # batch-stacked conv0 output rows
    m1 = (H1 + 2) * bb - 2                # batch-stacked conv1 output rows

    # ---- mapping network: pixel-norm -> fc -> lrelu -> fc -> lrelu ----------
    z = z_ref[0]                                                   # (bb, D)
    zn = z * jax.lax.rsqrt(jnp.mean(z * z, axis=-1, keepdims=True) + 1e-8)
    h = _lrelu(jnp.dot(zn, fc1_w_ref[...],
                       preferred_element_type=jnp.float32) + fc1_b_ref[...])
    w = _lrelu(jnp.dot(h, fc2_w_ref[...],
                       preferred_element_type=jnp.float32) + fc2_b_ref[...])

    # ---- all style affines in ONE matmul; 128-lane-aligned segments ---------
    s_all = jnp.dot(w, aff_w_ref[...],
                    preferred_element_type=jnp.float32) + aff_b_ref[...]
    s0_t = s_all[:, _A_S0T:_A_S0T + 3 * W0 * C]     # (bb, 192)
    s1_t = s_all[:, _A_S1T:_A_S1T + W0 * C]         # (bb, 64)
    srgb_t = s_all[:, _A_SRGB:_A_SRGB + W1 * C]     # (bb, 128)
    s0_r = s_all[:, _A_S0R:_A_S0R + C]              # (bb, 16)
    s1_r = s_all[:, _A_S1R:_A_S1R + C]              # (bb, 16)

    # ---- per-sample demod factors (lanes pre-tiled); deformed W used for d0 -
    d0 = jax.lax.rsqrt(jnp.dot(s0_r * s0_r, wsq0_ref[...],
                               preferred_element_type=jnp.float32) + 1e-8)
    d1 = jax.lax.rsqrt(jnp.dot(s1_r * s1_r, wsq1_ref[...],
                               preferred_element_type=jnp.float32) + 1e-8)

    e0 = e0_ref[...]                                 # (m0, bb) row->sample map
    e1 = e1_ref[...]                                 # (m1, bb)

    # ---- conv0 (deformed weight): one deep-K batch-stacked dot --------------
    # const_cat already holds the 3 dy-shifted, zero-padded, batch-stacked
    # copies of the learned constant along the lane dim (m0, 3*W0*C).
    s0_rows = jnp.dot(e0, s0_t, preferred_element_type=jnp.float32)
    xin0 = (const_cat_ref[...] * s0_rows).astype(jnp.bfloat16)
    acc0 = jnp.dot(xin0, w0_ref[...], preferred_element_type=jnp.float32)
    d0_rows = jnp.dot(e0, d0, preferred_element_type=jnp.float32)
    y0 = _lrelu(acc0 * d0_rows + b0_ref[...])        # (m0, W0*C)

    # ---- modulate by s1, then fuse {junk-drop, 2x row upsample, zero-pad} ---
    # into ONE selection matmul R1 -> padded stacked conv1 input (bb*(H1+2), 64)
    s1_rows = jnp.dot(e0, s1_t, preferred_element_type=jnp.float32)
    y0m = (y0 * s1_rows).astype(jnp.bfloat16)
    x1p = jnp.dot(r1_ref[...], y0m,
                  preferred_element_type=jnp.float32).astype(jnp.bfloat16)

    # ---- conv1 (column-upsample folded into weights): 3 batch-stacked dots --
    acc1 = jnp.dot(x1p[0:m1], w1_ref[0], preferred_element_type=jnp.float32)
    acc1 = acc1 + jnp.dot(x1p[1:m1 + 1], w1_ref[1],
                          preferred_element_type=jnp.float32)
    acc1 = acc1 + jnp.dot(x1p[2:m1 + 2], w1_ref[2],
                          preferred_element_type=jnp.float32)
    d1_rows = jnp.dot(e1, d1, preferred_element_type=jnp.float32)
    y1 = _lrelu(acc1 * d1_rows + b1_ref[...])        # (m1, W1*C)

    # ---- toRGB (1x1 modulated, no demod): compact valid rows, one fused dot -
    srgb_rows = jnp.dot(e1, srgb_t, preferred_element_type=jnp.float32)
    xm = jnp.dot(csel_ref[...], y1 * srgb_rows,
                 preferred_element_type=jnp.float32).astype(jnp.bfloat16)
    img = jnp.dot(xm, wrgb_ref[...],
                  preferred_element_type=jnp.float32) + brgb_ref[...]
    o_ref[...] = img                                 # (bb*H1, 3*W1) lane-dense


def _full_spec(arr):
    nd = arr.ndim
    return pl.BlockSpec(arr.shape, lambda i, nd=nd: (0,) * nd)


def generator_forward(z, prep):
    B = z.shape[0]
    C = CHANNELS
    H0 = W0 = BASE_RES
    H1 = W1 = 2 * BASE_RES
    f32, bf16 = jnp.float32, jnp.bfloat16

    nb = 2 if (B % 2 == 0 and B >= 2) else 1         # 2 parallel blocks -> v7x 2 TCs
    bb = B // nb
    m0 = (H0 + 2) * bb - 2
    m1 = (H1 + 2) * bb - 2

    # ---- batch-block-dependent selection/broadcast matrices (constants under jit)
    r = jnp.arange((H0 + 2) * bb)
    psel = (r[:, None] % (H0 + 2) == jnp.arange(H0)[None, :] + 1).astype(f32)
    cps = psel @ prep["const2"]                      # padded stacked const rows
    const_cat = jnp.concatenate(
        [cps[0:m0], cps[1:m0 + 1], cps[2:m0 + 2]], axis=1)        # (m0, 3*W0*C)

    e0 = (jnp.arange(m0)[:, None] // (H0 + 2) ==
          jnp.arange(bb)[None, :]).astype(f32)                     # (m0, bb)
    e1 = (jnp.arange(m1)[:, None] // (H1 + 2) ==
          jnp.arange(bb)[None, :]).astype(f32)                     # (m1, bb)

    rr = jnp.arange((H1 + 2) * bb)
    interior = (rr % (H1 + 2) >= 1) & (rr % (H1 + 2) <= H1)
    src = (rr // (H1 + 2)) * (H0 + 2) + (rr % (H1 + 2) - 1) // 2
    r1 = (interior[:, None] &
          (jnp.arange(m0)[None, :] == src[:, None])).astype(bf16)  # (bb*(H1+2), m0)

    qq = jnp.arange(H1 * bb)
    csel = (jnp.arange(m1)[None, :] ==
            ((qq // H1) * (H1 + 2) + qq % H1)[:, None]).astype(f32)  # (bb*H1, m1)

    z3 = z.reshape(nb, bb, LATENT_DIM)

    operands = (z3, prep["fc1_w"], prep["fc1_b"], prep["fc2_w"], prep["fc2_b"],
                prep["aff_w"], prep["aff_b"], prep["wsq0_t"], prep["wsq1_t"],
                prep["b0_t"], prep["b1_t"], const_cat, prep["w0stack"],
                prep["w1fold"], prep["wrgb_cat"], prep["rgb_b_row"],
                e0, e1, r1, csel)
    in_specs = [pl.BlockSpec((1, bb, LATENT_DIM), lambda i: (i, 0, 0))]
    in_specs += [_full_spec(a) for a in operands[1:]]

    out = pl.pallas_call(
        functools.partial(_generator_kernel, bb=bb),
        grid=(nb,),
        in_specs=in_specs,
        out_specs=pl.BlockSpec((bb * H1, 3 * W1), lambda i: (i, 0)),
        out_shape=jax.ShapeDtypeStruct((B * H1, 3 * W1), jnp.float32),
        compiler_params=pltpu.CompilerParams(dimension_semantics=("parallel",)),
    )(*operands)

    # lane-dense kernel output -> NCHW; tiny (1.5 KB) reshape/transpose outside.
    return out.reshape(B, H1, 3, W1).transpose(0, 2, 1, 3)


# ----------------------------------------------------------------------------
# Parameters (deterministic, synthetic — no checkpoint load)
# ----------------------------------------------------------------------------
def init_params(key):
    D, C, K2 = LATENT_DIM, CHANNELS, 9
    ks = jax.random.split(key, 12)

    def nrm(k, shape, scale):
        return scale * jax.random.normal(k, shape, jnp.float32)

    p = {}
    p["fc1_w"] = nrm(ks[0], (D, D), 1.0 / math.sqrt(D))
    p["fc1_b"] = jnp.zeros((D,), jnp.float32)
    p["fc2_w"] = nrm(ks[1], (D, D), 1.0 / math.sqrt(D))
    p["fc2_b"] = jnp.zeros((D,), jnp.float32)
    p["const"] = nrm(ks[2], (1, BASE_RES, BASE_RES, C), 1.0)
    p["A0_w"] = nrm(ks[3], (D, C), 1.0 / math.sqrt(D))
    p["A0_b"] = jnp.ones((C,), jnp.float32)      # StyleGAN2 modulation bias = 1
    p["A1_w"] = nrm(ks[4], (D, C), 1.0 / math.sqrt(D))
    p["A1_b"] = jnp.ones((C,), jnp.float32)
    p["Argb_w"] = nrm(ks[5], (D, C), 1.0 / math.sqrt(D))
    p["Argb_b"] = jnp.ones((C,), jnp.float32)
    p["conv0_w"] = nrm(ks[6], (K2, C, C), 1.0 / math.sqrt(C * K2))
    p["conv0_b"] = jnp.zeros((C,), jnp.float32)
    p["conv1_w"] = nrm(ks[7], (K2, C, C), 1.0 / math.sqrt(C * K2))
    p["conv1_b"] = jnp.zeros((C,), jnp.float32)
    p["rgb_w"] = nrm(ks[8], (1, C, 3), 1.0 / math.sqrt(C))
    p["rgb_b"] = jnp.zeros((3,), jnp.float32)

    # fixed weight deformation (state_dict['shift'] surrogate), layer_ix = 0
    shift = nrm(ks[9], (K2, C, C), 0.05)
    p["shift_direction"] = shift
    p["scale"] = jnp.linalg.norm(shift)                          # self.scale
    p["direction_to_basis_coefs"] = jnp.ones((1,), jnp.float32)  # set to ones
    p["deform_amplitude"] = jnp.float32(1.0)
    return p


def prepare_params(p):
    """One-time weight preprocessing (deformation fold, banded weights, upsample
    fold, style tiling) — mirrors the module baking the deformation into state."""
    C = CHANNELS
    H0 = W0 = BASE_RES
    H1 = W1 = 2 * BASE_RES
    f32, bf16 = jnp.float32, jnp.bfloat16

    # deformed conv0 weight: W_eff = W + amplitude * coef * scale * (shift/scale)
    scale = jnp.maximum(p["scale"], jnp.float32(1e-12))
    basis = p["shift_direction"] / scale
    coef = p["direction_to_basis_coefs"][0]
    w0_eff = p["conv0_w"] + p["deform_amplitude"] * coef * scale * basis
    w1_eff = p["conv1_w"]
    # TODO(synk): per-batch shifts from deformate(0, batch_shifts) are not exercised
    # in forward(); only the fixed unit-amplitude deformation is baked in.

    prep = {}
    prep["fc1_w"] = p["fc1_w"]
    prep["fc1_b"] = p["fc1_b"].reshape(1, -1)
    prep["fc2_w"] = p["fc2_w"]
    prep["fc2_b"] = p["fc2_b"].reshape(1, -1)

    # merged style affine, segments 128-lane aligned (dead columns in between)
    aff_w = jnp.zeros((LATENT_DIM, _A_W), f32)
    aff_b = jnp.zeros((1, _A_W), f32)
    segs = [
        (_A_S0T, jnp.tile(p["A0_w"], (1, 3 * W0)), jnp.tile(p["A0_b"], 3 * W0)),
        (_A_S1T, jnp.tile(p["A1_w"], (1, W0)), jnp.tile(p["A1_b"], W0)),
        (_A_SRGB, jnp.tile(p["Argb_w"], (1, W1)), jnp.tile(p["Argb_b"], W1)),
        (_A_S0R, p["A0_w"], p["A0_b"]),
        (_A_S1R, p["A1_w"], p["A1_b"]),
    ]
    for off, wseg, bseg in segs:
        aff_w = aff_w.at[:, off:off + wseg.shape[1]].set(wseg)
        aff_b = aff_b.at[0, off:off + bseg.shape[0]].set(bseg)
    prep["aff_w"] = aff_w
    prep["aff_b"] = aff_b

    # learned constant in (rows=y, cols=(x,c)) layout
    prep["const2"] = p["const"].reshape(H0, W0 * C)

    # conv0 banded weight, boundary taps omitted (no lane padding needed),
    # stacked over dy into one deep-K matrix (3*W0*C, W0*C).
    w0s = jnp.zeros((3 * W0 * C, W0 * C), f32)
    for dy in range(3):
        for xo in range(W0):
            for dx in range(3):
                xi = xo + dx - 1
                if 0 <= xi < W0:
                    w0s = w0s.at[dy * W0 * C + xi * C: dy * W0 * C + (xi + 1) * C,
                                 xo * C:(xo + 1) * C].set(w0_eff[dy * 3 + dx])
    prep["w0stack"] = w0s.astype(bf16)

    # conv1 banded weight with the 2x column-upsample folded in:
    # input is the row-doubled (not column-doubled) feature, W0*C lanes.
    w1f = jnp.zeros((3, W0 * C, W1 * C), f32)
    for dy in range(3):
        for xo in range(W1):
            for dx in range(3):
                xp = xo + dx
                if 1 <= xp <= W1:
                    xs = (xp - 1) // 2
                    w1f = w1f.at[dy, xs * C:(xs + 1) * C,
                                 xo * C:(xo + 1) * C].add(w1_eff[dy * 3 + dx])
    prep["w1fold"] = w1f.astype(bf16)

    # demod weight-sums (DEFORMED weight for layer 0), tiled to output lanes
    prep["wsq0_t"] = jnp.tile(jnp.sum(w0_eff * w0_eff, axis=0), (1, W0))
    prep["wsq1_t"] = jnp.tile(jnp.sum(w1_eff * w1_eff, axis=0), (1, W1))
    prep["b0_t"] = jnp.tile(p["conv0_b"], W0).reshape(1, -1)
    prep["b1_t"] = jnp.tile(p["conv1_b"], W1).reshape(1, -1)

    # toRGB weights fused across channels: (W1*C, 3*W1), output lanes = (c, x)
    wrgb = jnp.zeros((W1 * C, 3 * W1), f32)
    for c in range(3):
        for x in range(W1):
            wrgb = wrgb.at[x * C:(x + 1) * C, c * W1 + x].set(p["rgb_w"][0, :, c])
    prep["wrgb_cat"] = wrgb.astype(bf16)
    prep["rgb_b_row"] = jnp.repeat(p["rgb_b"], W1).reshape(1, -1)   # (1, 3*W1)
    return prep


# ----------------------------------------------------------------------------
if __name__ == "__main__":
    key = jax.random.PRNGKey(0)
    params = init_params(key)
    prep = prepare_params(params)

    B = 4
    z = jax.random.normal(jax.random.fold_in(key, 123), (B, LATENT_DIM),
                          jnp.float32)

    fwd = jax.jit(lambda zz: generator_forward(zz, prep))
    img = fwd(z)
    jax.block_until_ready(img)

    assert img.shape == (B, 3, 8, 8), img.shape
    assert img.dtype == jnp.float32
    assert bool(jnp.all(jnp.isfinite(img)))
    print("KERNEL_OK")
</pallas_src>

<mosaic_0001>
module attributes {stable_mosaic.version = 11 : i64} {
  func.func @_generator_kernel(%arg0: i32, %arg1: memref<1x2x32xf32, #tpu.memory_space<vmem>>, %arg2: memref<32x32xf32, #tpu.memory_space<vmem>>, %arg3: memref<1x32xf32, #tpu.memory_space<vmem>>, %arg4: memref<32x32xf32, #tpu.memory_space<vmem>>, %arg5: memref<1x32xf32, #tpu.memory_space<vmem>>, %arg6: memref<32x656xf32, #tpu.memory_space<vmem>>, %arg7: memref<1x656xf32, #tpu.memory_space<vmem>>, %arg8: memref<16x64xf32, #tpu.memory_space<vmem>>, %arg9: memref<16x128xf32, #tpu.memory_space<vmem>>, %arg10: memref<1x64xf32, #tpu.memory_space<vmem>>, %arg11: memref<1x128xf32, #tpu.memory_space<vmem>>, %arg12: memref<10x192xf32, #tpu.memory_space<vmem>>, %arg13: memref<192x64xbf16, #tpu.memory_space<vmem>>, %arg14: memref<3x64x128xbf16, #tpu.memory_space<vmem>>, %arg15: memref<128x24xbf16, #tpu.memory_space<vmem>>, %arg16: memref<1x24xf32, #tpu.memory_space<vmem>>, %arg17: memref<10x2xf32, #tpu.memory_space<vmem>>, %arg18: memref<18x2xf32, #tpu.memory_space<vmem>>, %arg19: memref<20x10xbf16, #tpu.memory_space<vmem>>, %arg20: memref<16x18xf32, #tpu.memory_space<vmem>>, %arg21: memref<16x24xf32, #tpu.memory_space<vmem>>) attributes {dimension_semantics = [#tpu.dimension_semantics<parallel>], iteration_bounds = array<i64: 2>, scalar_prefetch = 0 : i64, scratch_operands = 0 : i64, tpu.core_type = #tpu.core_type<tc>, window_params = [{transform_indices = @transform_0, window_bounds = array<i64: 1, 2, 32>}, {pipeline_mode = #tpu.pipeline_mode<synchronous>, transform_indices = @transform_1, window_bounds = array<i64: 32, 32>}, {pipeline_mode = #tpu.pipeline_mode<synchronous>, transform_indices = @transform_2, window_bounds = array<i64: 1, 32>}, {pipeline_mode = #tpu.pipeline_mode<synchronous>, transform_indices = @transform_3, window_bounds = array<i64: 32, 32>}, {pipeline_mode = #tpu.pipeline_mode<synchronous>, transform_indices = @transform_4, window_bounds = array<i64: 1, 32>}, {pipeline_mode = #tpu.pipeline_mode<synchronous>, transform_indices = @transform_5, window_bounds = array<i64: 32, 656>}, {pipeline_mode = #tpu.pipeline_mode<synchronous>, transform_indices = @transform_6, window_bounds = array<i64: 1, 656>}, {pipeline_mode = #tpu.pipeline_mode<synchronous>, transform_indices = @transform_7, window_bounds = array<i64: 16, 64>}, {pipeline_mode = #tpu.pipeline_mode<synchronous>, transform_indices = @transform_8, window_bounds = array<i64: 16, 128>}, {pipeline_mode = #tpu.pipeline_mode<synchronous>, transform_indices = @transform_9, window_bounds = array<i64: 1, 64>}, {pipeline_mode = #tpu.pipeline_mode<synchronous>, transform_indices = @transform_10, window_bounds = array<i64: 1, 128>}, {pipeline_mode = #tpu.pipeline_mode<synchronous>, transform_indices = @transform_11, window_bounds = array<i64: 10, 192>}, {pipeline_mode = #tpu.pipeline_mode<synchronous>, transform_indices = @transform_12, window_bounds = array<i64: 192, 64>}, {pipeline_mode = #tpu.pipeline_mode<synchronous>, transform_indices = @transform_13, window_bounds = array<i64: 3, 64, 128>}, {pipeline_mode = #tpu.pipeline_mode<synchronous>, transform_indices = @transform_14, window_bounds = array<i64: 128, 24>}, {pipeline_mode = #tpu.pipeline_mode<synchronous>, transform_indices = @transform_15, window_bounds = array<i64: 1, 24>}, {pipeline_mode = #tpu.pipeline_mode<synchronous>, transform_indices = @transform_16, window_bounds = array<i64: 10, 2>}, {pipeline_mode = #tpu.pipeline_mode<synchronous>, transform_indices = @transform_17, window_bounds = array<i64: 18, 2>}, {pipeline_mode = #tpu.pipeline_mode<synchronous>, transform_indices = @transform_18, window_bounds = array<i64: 20, 10>}, {pipeline_mode = #tpu.pipeline_mode<synchronous>, transform_indices = @transform_19, window_bounds = array<i64: 16, 18>}, {transform_indices = @transform_20, window_bounds = array<i64: 16, 24>}]} {
    %c0 = arith.constant 0 : index
    %c0_0 = arith.constant 0 : index
    %c0_1 = arith.constant 0 : index
    %0 = vector.load %arg1[%c0, %c0_0, %c0_1] : memref<1x2x32xf32, #tpu.memory_space<vmem>>, vector<1x2x32xf32>
    %1 = vector.shape_cast %0 : vector<1x2x32xf32> to vector<2x32xf32>
    %2 = arith.mulf %1, %1 : vector<2x32xf32>
    %cst = arith.constant dense<0.000000e+00> : vector<2xf32>
    %3 = vector.multi_reduction <add>, %2, %cst [1] : vector<2x32xf32> to vector<2xf32>
    %4 = vector.shape_cast %3 : vector<2xf32> to vector<2x1xf32>
    %cst_2 = arith.constant 3.200000e+01 : f32
    %5 = vector.broadcast %cst_2 : f32 to vector<2x1xf32>
    %6 = arith.divf %4, %5 : vector<2x1xf32>
    %cst_3 = arith.constant 9.99999993E-9 : f32
    %7 = vector.broadcast %cst_3 : f32 to vector<2x1xf32>
    %8 = arith.addf %6, %7 : vector<2x1xf32>
    %9 = math.rsqrt %8 : vector<2x1xf32>
    %10 = vector.broadcast %9 : vector<2x1xf32> to vector<2x32xf32>
    %11 = arith.mulf %1, %10 : vector<2x32xf32>
    %c0_4 = arith.constant 0 : index
    %c0_5 = arith.constant 0 : index
    %12 = vector.load %arg2[%c0_4, %c0_5] : memref<32x32xf32, #tpu.memory_space<vmem>>, vector<32x32xf32>
    %cst_6 = arith.constant dense<0.000000e+00> : vector<2x32xf32>
    %13 = tpu.matmul %11, %12, %cst_6 {dimension_numbers = #tpu.dot_dimension_numbers<[1], [0], [0], [1], [0, 0, 1, 1], [], []>} : vector<2x32xf32>, vector<32x32xf32>, vector<2x32xf32> -> vector<2x32xf32>
    %c0_7 = arith.constant 0 : index
    %c0_8 = arith.constant 0 : index
    %14 = vector.load %arg3[%c0_7, %c0_8] : memref<1x32xf32, #tpu.memory_space<vmem>>, vector<1x32xf32>
    %15 = vector.broadcast %14 : vector<1x32xf32> to vector<2x32xf32>
    %16 = arith.addf %13, %15 : vector<2x32xf32>
    %cst_9 = arith.constant 0.000000e+00 : f32
    %17 = vector.broadcast %cst_9 : f32 to vector<2x32xf32>
    %18 = arith.cmpf oge, %16, %17 : vector<2x32xf32>
    %cst_10 = arith.constant 2.000000e-01 : f32
    %19 = vector.broadcast %cst_10 : f32 to vector<2x32xf32>
    %20 = arith.mulf %19, %16 : vector<2x32xf32>
    %21 = arith.select %18, %16, %20 : vector<2x32xi1>, vector<2x32xf32>
    %cst_11 = arith.constant 1.41421354 : f32
    %22 = vector.broadcast %cst_11 : f32 to vector<2x32xf32>
    %23 = arith.mulf %21, %22 : vector<2x32xf32>
    %c0_12 = arith.constant 0 : index
    %c0_13 = arith.constant 0 : index
    %24 = vector.load %arg4[%c0_12, %c0_13] : memref<32x32xf32, #tpu.memory_space<vmem>>, vector<32x32xf32>
    %cst_14 = arith.constant dense<0.000000e+00> : vector<2x32xf32>
    %25 = tpu.matmul %23, %24, %cst_14 {dimension_numbers = #tpu.dot_dimension_numbers<[1], [0], [0], [1], [0, 0, 1, 1], [], []>} : vector<2x32xf32>, vector<32x32xf32>, vector<2x32xf32> -> vector<2x32xf32>
    %c0_15 = arith.constant 0 : index
    %c0_16 = arith.constant 0 : index
    %26 = vector.load %arg5[%c0_15, %c0_16] : memref<1x32xf32, #tpu.memory_space<vmem>>, vector<1x32xf32>
    %27 = vector.broadcast %26 : vector<1x32xf32> to vector<2x32xf32>
    %28 = arith.addf %25, %27 : vector<2x32xf32>
    %cst_17 = arith.constant 0.000000e+00 : f32
    %29 = vector.broadcast %cst_17 : f32 to vector<2x32xf32>
    %30 = arith.cmpf oge, %28, %29 : vector<2x32xf32>
    %cst_18 = arith.constant 2.000000e-01 : f32
    %31 = vector.broadcast %cst_18 : f32 to vector<2x32xf32>
    %32 = arith.mulf %31, %28 : vector<2x32xf32>
    %33 = arith.select %30, %28, %32 : vector<2x32xi1>, vector<2x32xf32>
    %cst_19 = arith.constant 1.41421354 : f32
    %34 = vector.broadcast %cst_19 : f32 to vector<2x32xf32>
    %35 = arith.mulf %33, %34 : vector<2x32xf32>
    %c0_20 = arith.constant 0 : index
    %c0_21 = arith.constant 0 : index
    %36 = vector.load %arg6[%c0_20, %c0_21] : memref<32x656xf32, #tpu.memory_space<vmem>>, vector<32x656xf32>
    %cst_22 = arith.constant dense<0.000000e+00> : vector<2x656xf32>
    %37 = tpu.matmul %35, %36, %cst_22 {dimension_numbers = #tpu.dot_dimension_numbers<[1], [0], [0], [1], [0, 0, 1, 1], [], []>} : vector<2x32xf32>, vector<32x656xf32>, vector<2x656xf32> -> vector<2x656xf32>
    %c0_23 = arith.constant 0 : index
    %c0_24 = arith.constant 0 : index
    %38 = vector.load %arg7[%c0_23, %c0_24] : memref<1x656xf32, #tpu.memory_space<vmem>>, vector<1x656xf32>
    %39 = vector.broadcast %38 : vector<1x656xf32> to vector<2x656xf32>
    %40 = arith.addf %37, %39 : vector<2x656xf32>
    %41 = vector.extract_strided_slice %40 {offsets = [0, 0], sizes = [2, 192], strides = [1, 1]} : vector<2x656xf32> to vector<2x192xf32>
    %42 = vector.extract_strided_slice %40 {offsets = [0, 256], sizes = [2, 64], strides = [1, 1]} : vector<2x656xf32> to vector<2x64xf32>
    %43 = vector.extract_strided_slice %40 {offsets = [0, 384], sizes = [2, 128], strides = [1, 1]} : vector<2x656xf32> to vector<2x128xf32>
    %44 = vector.extract_strided_slice %40 {offsets = [0, 512], sizes = [2, 16], strides = [1, 1]} : vector<2x656xf32> to vector<2x16xf32>
    %45 = vector.extract_strided_slice %40 {offsets = [0, 640], sizes = [2, 16], strides = [1, 1]} : vector<2x656xf32> to vector<2x16xf32>
    %46 = arith.mulf %44, %44 : vector<2x16xf32>
    %c0_25 = arith.constant 0 : index
    %c0_26 = arith.constant 0 : index
    %47 = vector.load %arg8[%c0_25, %c0_26] : memref<16x64xf32, #tpu.memory_space<vmem>>, vector<16x64xf32>
    %cst_27 = arith.constant dense<0.000000e+00> : vector<2x64xf32>
    %48 = tpu.matmul %46, %47, %cst_27 {dimension_numbers = #tpu.dot_dimension_numbers<[1], [0], [0], [1], [0, 0, 1, 1], [], []>} : vector<2x16xf32>, vector<16x64xf32>, vector<2x64xf32> -> vector<2x64xf32>
    %cst_28 = arith.constant 9.99999993E-9 : f32
    %49 = vector.broadcast %cst_28 : f32 to vector<2x64xf32>
    %50 = arith.addf %48, %49 : vector<2x64xf32>
    %51 = math.rsqrt %50 : vector<2x64xf32>
    %52 = arith.mulf %45, %45 : vector<2x16xf32>
    %c0_29 = arith.constant 0 : index
    %c0_30 = arith.constant 0 : index
    %53 = vector.load %arg9[%c0_29, %c0_30] : memref<16x128xf32, #tpu.memory_space<vmem>>, vector<16x128xf32>
    %cst_31 = arith.constant dense<0.000000e+00> : vector<2x128xf32>
    %54 = tpu.matmul %52, %53, %cst_31 {dimension_numbers = #tpu.dot_dimension_numbers<[1], [0], [0], [1], [0, 0, 1, 1], [], []>} : vector<2x16xf32>, vector<16x128xf32>, vector<2x128xf32> -> vector<2x128xf32>
    %cst_32 = arith.constant 9.99999993E-9 : f32
    %55 = vector.broadcast %cst_32 : f32 to vector<2x128xf32>
    %56 = arith.addf %54, %55 : vector<2x128xf32>
    %57 = math.rsqrt %56 : vector<2x128xf32>
    %c0_33 = arith.constant 0 : index
    %c0_34 = arith.constant 0 : index
    %58 = vector.load %arg17[%c0_33, %c0_34] : memref<10x2xf32, #tpu.memory_space<vmem>>, vector<10x2xf32>
    %c0_35 = arith.constant 0 : index
    %c0_36 = arith.constant 0 : index
    %59 = vector.load %arg18[%c0_35, %c0_36] : memref<18x2xf32, #tpu.memory_space<vmem>>, vector<18x2xf32>
    %cst_37 = arith.constant dense<0.000000e+00> : vector<10x192xf32>
    %60 = tpu.matmul %58, %41, %cst_37 {dimension_numbers = #tpu.dot_dimension_numbers<[1], [0], [0], [1], [0, 0, 1, 1], [], []>} : vector<10x2xf32>, vector<2x192xf32>, vector<10x192xf32> -> vector<10x192xf32>
    %c0_38 = arith.constant 0 : index
    %c0_39 = arith.constant 0 : index
    %61 = vector.load %arg12[%c0_38, %c0_39] : memref<10x192xf32, #tpu.memory_space<vmem>>, vector<10x192xf32>
    %62 = arith.mulf %61, %60 : vector<10x192xf32>
    %63 = arith.truncf %62 : vector<10x192xf32> to vector<10x192xbf16>
    %c0_40 = arith.constant 0 : index
    %c0_41 = arith.constant 0 : index
    %64 = vector.load %arg13[%c0_40, %c0_41] : memref<192x64xbf16, #tpu.memory_space<vmem>>, vector<192x64xbf16>
    %cst_42 = arith.constant dense<0.000000e+00> : vector<10x64xf32>
    %65 = tpu.matmul %63, %64, %cst_42 {dimension_numbers = #tpu.dot_dimension_numbers<[1], [0], [0], [1], [0, 0, 1, 1], [], []>} : vector<10x192xbf16>, vector<192x64xbf16>, vector<10x64xf32> -> vector<10x64xf32>
    %cst_43 = arith.constant dense<0.000000e+00> : vector<10x64xf32>
    %66 = tpu.matmul %58, %51, %cst_43 {dimension_numbers = #tpu.dot_dimension_numbers<[1], [0], [0], [1], [0, 0, 1, 1], [], []>} : vector<10x2xf32>, vector<2x64xf32>, vector<10x64xf32> -> vector<10x64xf32>
    %67 = arith.mulf %65, %66 : vector<10x64xf32>
    %c0_44 = arith.constant 0 : index
    %c0_45 = arith.constant 0 : index
    %68 = vector.load %arg10[%c0_44, %c0_45] : memref<1x64xf32, #tpu.memory_space<vmem>>, vector<1x64xf32>
    %69 = vector.broadcast %68 : vector<1x64xf32> to vector<10x64xf32>
    %70 = arith.addf %67, %69 : vector<10x64xf32>
    %cst_46 = arith.constant 0.000000e+00 : f32
    %71 = vector.broadcast %cst_46 : f32 to vector<10x64xf32>
    %72 = arith.cmpf oge, %70, %71 : vector<10x64xf32>
    %cst_47 = arith.constant 2.000000e-01 : f32
    %73 = vector.broadcast %cst_47 : f32 to vector<10x64xf32>
    %74 = arith.mulf %73, %70 : vector<10x64xf32>
    %75 = arith.select %72, %70, %74 : vector<10x64xi1>, vector<10x64xf32>
    %cst_48 = arith.constant 1.41421354 : f32
    %76 = vector.broadcast %cst_48 : f32 to vector<10x64xf32>
    %77 = arith.mulf %75, %76 : vector<10x64xf32>
    %cst_49 = arith.constant dense<0.000000e+00> : vector<10x64xf32>
    %78 = tpu.matmul %58, %42, %cst_49 {dimension_numbers = #tpu.dot_dimension_numbers<[1], [0], [0], [1], [0, 0, 1, 1], [], []>} : vector<10x2xf32>, vector<2x64xf32>, vector<10x64xf32> -> vector<10x64xf32>
    %79 = arith.mulf %77, %78 : vector<10x64xf32>
    %80 = arith.truncf %79 : vector<10x64xf32> to vector<10x64xbf16>
    %c0_50 = arith.constant 0 : index
    %c0_51 = arith.constant 0 : index
    %81 = vector.load %arg19[%c0_50, %c0_51] : memref<20x10xbf16, #tpu.memory_space<vmem>>, vector<20x10xbf16>
    %cst_52 = arith.constant dense<0.000000e+00> : vector<20x64xf32>
    %82 = tpu.matmul %81, %80, %cst_52 {dimension_numbers = #tpu.dot_dimension_numbers<[1], [0], [0], [1], [0, 0, 1, 1], [], []>} : vector<20x10xbf16>, vector<10x64xbf16>, vector<20x64xf32> -> vector<20x64xf32>
    %83 = arith.truncf %82 : vector<20x64xf32> to vector<20x64xbf16>
    %84 = vector.extract_strided_slice %83 {offsets = [0, 0], sizes = [18, 64], strides = [1, 1]} : vector<20x64xbf16> to vector<18x64xbf16>
    %c0_53 = arith.constant 0 : index
    %c0_54 = arith.constant 0 : index
    %c0_55 = arith.constant 0 : index
    %85 = vector.load %arg14[%c0_53, %c0_54, %c0_55] : memref<3x64x128xbf16, #tpu.memory_space<vmem>>, vector<1x64x128xbf16>
    %86 = vector.shape_cast %85 : vector<1x64x128xbf16> to vector<64x128xbf16>
    %cst_56 = arith.constant dense<0.000000e+00> : vector<18x128xf32>
    %87 = tpu.matmul %84, %86, %cst_56 {dimension_numbers = #tpu.dot_dimension_numbers<[1], [0], [0], [1], [0, 0, 1, 1], [], []>} : vector<18x64xbf16>, vector<64x128xbf16>, vector<18x128xf32> -> vector<18x128xf32>
    %88 = vector.extract_strided_slice %83 {offsets = [1, 0], sizes = [18, 64], strides = [1, 1]} : vector<20x64xbf16> to vector<18x64xbf16>
    %c1 = arith.constant 1 : index
    %c0_57 = arith.constant 0 : index
    %c0_58 = arith.constant 0 : index
    %89 = vector.load %arg14[%c1, %c0_57, %c0_58] : memref<3x64x128xbf16, #tpu.memory_space<vmem>>, vector<1x64x128xbf16>
    %90 = vector.shape_cast %89 : vector<1x64x128xbf16> to vector<64x128xbf16>
    %cst_59 = arith.constant dense<0.000000e+00> : vector<18x128xf32>
    %91 = tpu.matmul %88, %90, %cst_59 {dimension_numbers = #tpu.dot_dimension_numbers<[1], [0], [0], [1], [0, 0, 1, 1], [], []>} : vector<18x64xbf16>, vector<64x128xbf16>, vector<18x128xf32> -> vector<18x128xf32>
    %92 = arith.addf %87, %91 : vector<18x128xf32>
    %93 = vector.extract_strided_slice %83 {offsets = [2, 0], sizes = [18, 64], strides = [1, 1]} : vector<20x64xbf16> to vector<18x64xbf16>
    %c2 = arith.constant 2 : index
    %c0_60 = arith.constant 0 : index
    %c0_61 = arith.constant 0 : index
    %94 = vector.load %arg14[%c2, %c0_60, %c0_61] : memref<3x64x128xbf16, #tpu.memory_space<vmem>>, vector<1x64x128xbf16>
    %95 = vector.shape_cast %94 : vector<1x64x128xbf16> to vector<64x128xbf16>
    %cst_62 = arith.constant dense<0.000000e+00> : vector<18x128xf32>
    %96 = tpu.matmul %93, %95, %cst_62 {dimension_numbers = #tpu.dot_dimension_numbers<[1], [0], [0], [1], [0, 0, 1, 1], [], []>} : vector<18x64xbf16>, vector<64x128xbf16>, vector<18x128xf32> -> vector<18x128xf32>
    %97 = arith.addf %92, %96 : vector<18x128xf32>
    %cst_63 = arith.constant dense<0.000000e+00> : vector<18x128xf32>
    %98 = tpu.matmul %59, %57, %cst_63 {dimension_numbers = #tpu.dot_dimension_numbers<[1], [0], [0], [1], [0, 0, 1, 1], [], []>} : vector<18x2xf32>, vector<2x128xf32>, vector<18x128xf32> -> vector<18x128xf32>
    %99 = arith.mulf %97, %98 : vector<18x128xf32>
    %c0_64 = arith.constant 0 : index
    %c0_65 = arith.constant 0 : index
    %100 = vector.load %arg11[%c0_64, %c0_65] : memref<1x128xf32, #tpu.memory_space<vmem>>, vector<1x128xf32>
    %101 = vector.broadcast %100 : vector<1x128xf32> to vector<18x128xf32>
    %102 = arith.addf %99, %101 : vector<18x128xf32>
    %cst_66 = arith.constant 0.000000e+00 : f32
    %103 = vector.broadcast %cst_66 : f32 to vector<18x128xf32>
    %104 = arith.cmpf oge, %102, %103 : vector<18x128xf32>
    %cst_67 = arith.constant 2.000000e-01 : f32
    %105 = vector.broadcast %cst_67 : f32 to vector<18x128xf32>
    %106 = arith.mulf %105, %102 : vector<18x128xf32>
    %107 = arith.select %104, %102, %106 : vector<18x128xi1>, vector<18x128xf32>
    %cst_68 = arith.constant 1.41421354 : f32
    %108 = vector.broadcast %cst_68 : f32 to vector<18x128xf32>
    %109 = arith.mulf %107, %108 : vector<18x128xf32>
    %cst_69 = arith.constant dense<0.000000e+00> : vector<18x128xf32>
    %110 = tpu.matmul %59, %43, %cst_69 {dimension_numbers = #tpu.dot_dimension_numbers<[1], [0], [0], [1], [0, 0, 1, 1], [], []>} : vector<18x2xf32>, vector<2x128xf32>, vector<18x128xf32> -> vector<18x128xf32>
    %c0_70 = arith.constant 0 : index
    %c0_71 = arith.constant 0 : index
    %111 = vector.load %arg20[%c0_70, %c0_71] : memref<16x18xf32, #tpu.memory_space<vmem>>, vector<16x18xf32>
    %112 = arith.mulf %109, %110 : vector<18x128xf32>
    %cst_72 = arith.constant dense<0.000000e+00> : vector<16x128xf32>
    %113 = tpu.matmul %111, %112, %cst_72 {dimension_numbers = #tpu.dot_dimension_numbers<[1], [0], [0], [1], [0, 0, 1, 1], [], []>} : vector<16x18xf32>, vector<18x128xf32>, vector<16x128xf32> -> vector<16x128xf32>
    %114 = arith.truncf %113 : vector<16x128xf32> to vector<16x128xbf16>
    %c0_73 = arith.constant 0 : index
    %c0_74 = arith.constant 0 : index
    %115 = vector.load %arg15[%c0_73, %c0_74] : memref<128x24xbf16, #tpu.memory_space<vmem>>, vector<128x24xbf16>
    %cst_75 = arith.constant dense<0.000000e+00> : vector<16x24xf32>
    %116 = tpu.matmul %114, %115, %cst_75 {dimension_numbers = #tpu.dot_dimension_numbers<[1], [0], [0], [1], [0, 0, 1, 1], [], []>} : vector<16x128xbf16>, vector<128x24xbf16>, vector<16x24xf32> -> vector<16x24xf32>
    %c0_76 = arith.constant 0 : index
    %c0_77 = arith.constant 0 : index
    %117 = vector.load %arg16[%c0_76, %c0_77] : memref<1x24xf32, #tpu.memory_space<vmem>>, vector<1x24xf32>
    %118 = vector.broadcast %117 : vector<1x24xf32> to vector<16x24xf32>
    %119 = arith.addf %116, %118 : vector<16x24xf32>
    %c0_78 = arith.constant 0 : index
    %c0_79 = arith.constant 0 : index
    %120 = vector.load %arg21[%c0_78, %c0_79] : memref<16x24xf32, #tpu.memory_space<vmem>>, vector<16x24xf32>
    tpu.vector_store %arg21[%c0_78, %c0_79], %119 {strides = array<i32>} : memref<16x24xf32, #tpu.memory_space<vmem>>, vector<16x24xf32>,
    return
  }
  func.func @transform_0(%arg0: i32) -> (i32, i32, i32) {
    %c0_i32 = arith.constant 0 : i32
    %c0_i32_0 = arith.constant 0 : i32
    %c0_i32_1 = arith.constant 0 : i32
    return %arg0, %c0_i32, %c0_i32_0 : i32, i32, i32
  }
  func.func @transform_1(%arg0: i32) -> (i32, i32) {
    %c0_i32 = arith.constant 0 : i32
    %c0_i32_0 = arith.constant 0 : i32
    %c0_i32_1 = arith.constant 0 : i32
    return %c0_i32, %c0_i32_0 : i32, i32
  }
  func.func @transform_2(%arg0: i32) -> (i32, i32) {
    %c0_i32 = arith.constant 0 : i32
    %c0_i32_0 = arith.constant 0 : i32
    %c0_i32_1 = arith.constant 0 : i32
    return %c0_i32, %c0_i32_0 : i32, i32
  }
  func.func @transform_3(%arg0: i32) -> (i32, i32) {
    %c0_i32 = arith.constant 0 : i32
    %c0_i32_0 = arith.constant 0 : i32
    %c0_i32_1 = arith.constant 0 : i32
    return %c0_i32, %c0_i32_0 : i32, i32
  }
  func.func @transform_4(%arg0: i32) -> (i32, i32) {
    %c0_i32 = arith.constant 0 : i32
    %c0_i32_0 = arith.constant 0 : i32
    %c0_i32_1 = arith.constant 0 : i32
    return %c0_i32, %c0_i32_0 : i32, i32
  }
  func.func @transform_5(%arg0: i32) -> (i32, i32) {
    %c0_i32 = arith.constant 0 : i32
    %c0_i32_0 = arith.constant 0 : i32
    %c0_i32_1 = arith.constant 0 : i32
    return %c0_i32, %c0_i32_0 : i32, i32
  }
  func.func @transform_6(%arg0: i32) -> (i32, i32) {
    %c0_i32 = arith.constant 0 : i32
    %c0_i32_0 = arith.constant 0 : i32
    %c0_i32_1 = arith.constant 0 : i32
    return %c0_i32, %c0_i32_0 : i32, i32
  }
  func.func @transform_7(%arg0: i32) -> (i32, i32) {
    %c0_i32 = arith.constant 0 : i32
    %c0_i32_0 = arith.constant 0 : i32
    %c0_i32_1 = arith.constant 0 : i32
    return %c0_i32, %c0_i32_0 : i32, i32
  }
  func.func @transform_8(%arg0: i32) -> (i32, i32) {
    %c0_i32 = arith.constant 0 : i32
    %c0_i32_0 = arith.constant 0 : i32
    %c0_i32_1 = arith.constant 0 : i32
    return %c0_i32, %c0_i32_0 : i32, i32
  }
  func.func @transform_9(%arg0: i32) -> (i32, i32) {
    %c0_i32 = arith.constant 0 : i32
    %c0_i32_0 = arith.constant 0 : i32
    %c0_i32_1 = arith.constant 0 : i32
    return %c0_i32, %c0_i32_0 : i32, i32
  }
  func.func @transform_10(%arg0: i32) -> (i32, i32) {
    %c0_i32 = arith.constant 0 : i32
    %c0_i32_0 = arith.constant 0 : i32
    %c0_i32_1 = arith.constant 0 : i32
    return %c0_i32, %c0_i32_0 : i32, i32
  }
  func.func @transform_11(%arg0: i32) -> (i32, i32) {
    %c0_i32 = arith.constant 0 : i32
    %c0_i32_0 = arith.constant 0 : i32
    %c0_i32_1 = arith.constant 0 : i32
    return %c0_i32, %c0_i32_0 : i32, i32
  }
  func.func @transform_12(%arg0: i32) -> (i32, i32) {
    %c0_i32 = arith.constant 0 : i32
    %c0_i32_0 = arith.constant 0 : i32
    %c0_i32_1 = arith.constant 0 : i32
    return %c0_i32, %c0_i32_0 : i32, i32
  }
  func.func @transform_13(%arg0: i32) -> (i32, i32, i32) {
    %c0_i32 = arith.constant 0 : i32
    %c0_i32_0 = arith.constant 0 : i32
    %c0_i32_1 = arith.constant 0 : i32
    %c0_i32_2 = arith.constant 0 : i32
    return %c0_i32, %c0_i32_0, %c0_i32_1 : i32, i32, i32
  }
  func.func @transform_14(%arg0: i32) -> (i32, i32) {
    %c0_i32 = arith.constant 0 : i32
    %c0_i32_0 = arith.constant 0 : i32
    %c0_i32_1 = arith.constant 0 : i32
    return %c0_i32, %c0_i32_0 : i32, i32
  }
  func.func @transform_15(%arg0: i32) -> (i32, i32) {
    %c0_i32 = arith.constant 0 : i32
    %c0_i32_0 = arith.constant 0 : i32
    %c0_i32_1 = arith.constant 0 : i32
    return %c0_i32, %c0_i32_0 : i32, i32
  }
  func.func @transform_16(%arg0: i32) -> (i32, i32) {
    %c0_i32 = arith.constant 0 : i32
    %c0_i32_0 = arith.constant 0 : i32
    %c0_i32_1 = arith.constant 0 : i32
    return %c0_i32, %c0_i32_0 : i32, i32
  }
  func.func @transform_17(%arg0: i32) -> (i32, i32) {
    %c0_i32 = arith.constant 0 : i32
    %c0_i32_0 = arith.constant 0 : i32
    %c0_i32_1 = arith.constant 0 : i32
    return %c0_i32, %c0_i32_0 : i32, i32
  }
  func.func @transform_18(%arg0: i32) -> (i32, i32) {
    %c0_i32 = arith.constant 0 : i32
    %c0_i32_0 = arith.constant 0 : i32
    %c0_i32_1 = arith.constant 0 : i32
    return %c0_i32, %c0_i32_0 : i32, i32
  }
  func.func @transform_19(%arg0: i32) -> (i32, i32) {
    %c0_i32 = arith.constant 0 : i32
    %c0_i32_0 = arith.constant 0 : i32
    %c0_i32_1 = arith.constant 0 : i32
    return %c0_i32, %c0_i32_0 : i32, i32
  }
  func.func @transform_20(%arg0: i32) -> (i32, i32) {
    %c0_i32 = arith.constant 0 : i32
    %c0_i32_0 = arith.constant 0 : i32
    return %arg0, %c0_i32 : i32, i32
  }
}

</mosaic_0001>

<llo_original>
// kernel: _lambda_.1
$region0: #{_lambda_.1}
  #allocation0 [shape = 'u32[]', space=smem, size = 0x4, offset = 0x4, fixed_abs, tag = 'smem constant byte address 0x4 - core index']
  #allocation1 [shape = 'u32[144,128]{1,0:T(1,128)}', space=vmem, size = 0x12000, scoped, tag = 'internal scratch']
  %s0 = inlined_call_operand.hbm [shape: f32[2,2,32], index: 0, kind: input, shape index: {}]
  %s1 = inlined_call_operand.hbm [shape: f32[32,32], index: 1, kind: input, shape index: {}]
  %s2 = inlined_call_operand.vmem [shape: f32[1,32], index: 2, kind: input, shape index: {}, may-alias: {2,4}]
  %s3 = inlined_call_operand.hbm [shape: f32[32,32], index: 3, kind: input, shape index: {}]
  %s4 = inlined_call_operand.vmem [shape: f32[1,32], index: 4, kind: input, shape index: {}, may-alias: {2,4}]
  %s5 = inlined_call_operand.vmem [shape: f32[32,656], index: 5, kind: input, shape index: {}]
  %s6 = inlined_call_operand.hbm [shape: f32[1,656], index: 6, kind: input, shape index: {}]
  %s7 = inlined_call_operand.hbm [shape: f32[16,64], index: 7, kind: input, shape index: {}]
  %s8 = inlined_call_operand.hbm [shape: f32[16,128], index: 8, kind: input, shape index: {}]
  %s9 = inlined_call_operand.vmem [shape: f32[1,64], index: 9, kind: input, shape index: {}]
  %s10 = inlined_call_operand.vmem [shape: f32[1,128], index: 10, kind: input, shape index: {}]
  %s11 = inlined_call_operand.vmem [shape: f32[10,192], index: 11, kind: input, shape index: {}]
  %s12 = inlined_call_operand.hbm [shape: bf16[192,64], index: 12, kind: input, shape index: {}]
  %s13 = inlined_call_operand.vmem [shape: bf16[3,64,128], index: 13, kind: input, shape index: {}]
  %s14 = inlined_call_operand.vmem [shape: bf16[128,24], index: 14, kind: input, shape index: {}]
  %s15 = inlined_call_operand.vmem [shape: f32[1,24], index: 15, kind: input, shape index: {}]
  %s16 = inlined_call_operand.vmem [shape: f32[10,2], index: 16, kind: input, shape index: {}]
  %s17 = inlined_call_operand.vmem [shape: f32[18,2], index: 17, kind: input, shape index: {}]
  %s18 = inlined_call_operand.vmem [shape: bf16[20,10], index: 18, kind: input, shape index: {}]
  %s19 = inlined_call_operand.vmem [shape: f32[16,18], index: 19, kind: input, shape index: {}]
  %s20 = inlined_call_operand.vmem [shape: f32[32,24], index: 20, kind: output, shape index: {}]
  %s21 = sld [smem:[#allocation0]]
  $region141: #{_lambda_.1} parent=0
    _
  %s23 = ssub.s32 1, %s21
  %s24 = scalar_select 0, %s23, %s21
  $region1: #{_lambda_.1} parent=0
    #allocation2 [shape = 'u8[2048]{0}', space=vmem, size = 0x800, scoped, tag = 'input window, operand 0']
    #allocation3 [shape = 's32[2]{0}', space=sflag, size = 0x8, scoped, tag = 'scoped memory for _lambda_.1']
    #allocation4 [shape = 'u8[16384]{0}', space=vmem, size = 0x4000, scoped, tag = 'input window, operand 1, single buffered']
    #allocation5 [shape = 's32[1]{0}', space=sflag, size = 0x4, scoped, tag = 'scoped memory for _lambda_.1']
    #allocation6 [shape = 'u8[16384]{0}', space=vmem, size = 0x4000, scoped, tag = 'input window, operand 3, single buffered']
    #allocation7 [shape = 'u8[3072]{0}', space=vmem, size = 0xc00, scoped, tag = 'input window, operand 6, single buffered']
    #allocation8 [shape = 's32[1]{0}', space=sflag, size = 0x4, scoped, tag = 'scoped memory for _lambda_.1']
    #allocation9 [shape = 'u8[8192]{0}', space=vmem, size = 0x2000, scoped, tag = 'input window, operand 7, single buffered']
    #allocation10 [shape = 'u8[8192]{0}', space=vmem, size = 0x2000, scoped, tag = 'input window, operand 8, single buffered']
    #allocation11 [shape = 's32[1]{0}', space=sflag, size = 0x4, scoped, tag = 'scoped memory for _lambda_.1']
    #allocation12 [shape = 'u8[49152]{0}', space=vmem, size = 0xc000, scoped, tag = 'input window, operand 12, single buffered']
    %25 = vsyncpa [#allocation3], 0
    %s26 = scalar_lea.sflag [#allocation3], 1
    %27 = vsyncpa %s26, 0
    %28 = vsyncpa [#allocation5], 0
    %29 = vsyncpa [#allocation8], 0
    %30 = vsyncpa [#allocation11], 0
    loop: start=0, step=1, limit=4
    $region2: #{_lambda_.1} parent=1 // loop_pre_header
      _
    $region3: #{_lambda_.1} parent=1 // loop_header
      %s32 = sphi 0, %s36
      %p33 = scmp.ge.s32.totalorder %s32, 4
      %s42 = sphi 0, %s44
      %s45 = sphi 0, %s42
      %s46 = sphi 0, %s45
      %s62 = sphi 0, %s46
      %s66 = sphi 0, %s66
      %s68 = sphi 0, %s66
      %s69 = sphi 0, %s68
      %s83 = sphi 0, %s69
      %s87 = sphi 0, %s87
      %s89 = sphi 0, %s87
      %s90 = sphi 0, %s89
      %s104 = sphi 0, %s90
      %s108 = sphi 0, %s108
      %s110 = sphi 0, %s108
      %s111 = sphi 0, %s110
      %s125 = sphi 0, %s111
      %s129 = sphi 0, %s129
      %s131 = sphi 0, %s129
      %s132 = sphi 0, %s131
      %s146 = sphi 0, %s132
      %s150 = sphi 0, %s150
      %s152 = sphi 0, %s150
      %s153 = sphi 0, %s152
      %s167 = sphi 0, %s153
      %s171 = sphi 0, %s171
      %s173 = sphi 0, %s171
      %s174 = sphi 0, %s173
      %s188 = sphi 0, %s174
      %s192 = sphi 0, %s192
      %s194 = sphi 0, %s192
      %s195 = sphi 0, %s194
      %s209 = sphi 0, %s195
      %s213 = sphi 0, %s213
      %s215 = sphi 0, %s213
      %s216 = sphi 0, %s215
      %s230 = sphi 0, %s216
      %s234 = sphi 0, %s234
      %s236 = sphi 0, %s234
      %s237 = sphi 0, %s236
      %s251 = sphi 0, %s237
      %s255 = sphi 0, %s255
      %s257 = sphi 0, %s255
      %s258 = sphi 0, %s257
      %s272 = sphi 0, %s258
      %s276 = sphi 0, %s276
      %s278 = sphi 0, %s276
      %s279 = sphi 0, %s278
      %s293 = sphi 0, %s279
      %s297 = sphi 0, %s297
      %s299 = sphi 0, %s297
      %s300 = sphi 0, %s299
      %s314 = sphi 0, %s300
      %s318 = sphi 0, %s318
      %s320 = sphi 0, %s318
      %s321 = sphi 0, %s320
      %s335 = sphi 0, %s321
      %s339 = sphi 0, %s339
      %s341 = sphi 0, %s339
      %s342 = sphi 0, %s341
      %s356 = sphi 0, %s342
      %s360 = sphi 0, %s360
      %s362 = sphi 0, %s360
      %s363 = sphi 0, %s362
      %s377 = sphi 0, %s363
      %s381 = sphi 0, %s381
      %s383 = sphi 0, %s381
      %s384 = sphi 0, %s383
      %s398 = sphi 0, %s384
      %s402 = sphi 0, %s402
      %s404 = sphi 0, %s402
      %s405 = sphi 0, %s404
      %s419 = sphi 0, %s405
      %s423 = sphi 0, %s423
      %s425 = sphi 0, %s423
      %s426 = sphi 0, %s425
      %s440 = sphi 0, %s426
      %s444 = sphi 0, %s444
      %s446 = sphi 0, %s444
      %s447 = sphi 0, %s446
      %s461 = sphi 0, %s447
      %s467 = sphi 0, %s469
      %s470 = sphi 0, %s467
      %s471 = sphi 0, %s470
      %s487 = sphi 0, %s471
    $region4: #{_lambda_.1} parent=1 // loop_header_branch
      %35 = sbr.rel (%p33) target = $region8
    $region5: #{_lambda_.1} parent=1 // loop_body
      %s37 = ssub.s32 %s32, 1
      %s38 = ssub.s32 %s32, 2
      %s39 = sadd.s32 %s32, 1
      %s40 = ssub.s32 %s32, %s39
      %p41 = scmp.eq.s32.totalorder %s40, 0
      %s43 = sadd.s32 %s42, 1
      %s44 = scalar_select %p41, %s42, %s43
      %p47 = pneg %p41
      %p48 = scmp.eq.s32.totalorder %s32, 1
      %p49 = por %p47, %p48
      %p50 = scmp.ne.s32.totalorder %s42, %s45
      %p51 = scmp.eq.s32.totalorder %s32, 0
      %p52 = por %p50, %p51
      %p53 = scmp.ne.s32.totalorder %s42, %s45
      %p54 = scmp.eq.s32.totalorder %s37, 1
      %p55 = por %p53, %p54
      %p56 = scmp.ne.s32.totalorder %s45, %s46
      %p57 = scmp.eq.s32.totalorder %s37, 0
      %p58 = por %p56, %p57
      %p59 = scmp.ne.s32.totalorder %s45, %s46
      %p60 = scmp.eq.s32.totalorder %s38, 1
      %p61 = por %p59, %p60
      %p63 = scmp.ne.s32.totalorder %s46, %s62
      %p64 = scmp.eq.s32.totalorder %s38, 0
      %p65 = por %p63, %p64
      %s67 = sadd.s32 %s66, 1
      %p70 = scmp.eq.s32.totalorder %s32, 1
      %p71 = scmp.ne.s32.totalorder %s66, %s68
      %p72 = scmp.eq.s32.totalorder %s32, 0
      %p73 = por %p71, %p72
      %p74 = scmp.ne.s32.totalorder %s66, %s68
      %p75 = scmp.eq.s32.totalorder %s37, 1
      %p76 = por %p74, %p75
      %p77 = scmp.ne.s32.totalorder %s68, %s69
      %p78 = scmp.eq.s32.totalorder %s37, 0
      %p79 = por %p77, %p78
      %p80 = scmp.ne.s32.totalorder %s68, %s69
      %p81 = scmp.eq.s32.totalorder %s38, 1
      %p82 = por %p80, %p81
      %p84 = scmp.ne.s32.totalorder %s69, %s83
      %p85 = scmp.eq.s32.totalorder %s38, 0
      %p86 = por %p84, %p85
      %s88 = sadd.s32 %s87, 1
      %p91 = scmp.eq.s32.totalorder %s32, 1
      %p92 = scmp.ne.s32.totalorder %s87, %s89
      %p93 = scmp.eq.s32.totalorder %s32, 0
      %p94 = por %p92, %p93
      %p95 = scmp.ne.s32.totalorder %s87, %s89
      %p96 = scmp.eq.s32.totalorder %s37, 1
      %p97 = por %p95, %p96
      %p98 = scmp.ne.s32.totalorder %s89, %s90
      %p99 = scmp.eq.s32.totalorder %s37, 0
      %p100 = por %p98, %p99
      %p101 = scmp.ne.s32.totalorder %s89, %s90
      %p102 = scmp.eq.s32.totalorder %s38, 1
      %p103 = por %p101, %p102
      %p105 = scmp.ne.s32.totalorder %s90, %s104
      %p106 = scmp.eq.s32.totalorder %s38, 0
      %p107 = por %p105, %p106
      %s109 = sadd.s32 %s108, 1
      %p112 = scmp.eq.s32.totalorder %s32, 1
      %p113 = scmp.ne.s32.totalorder %s108, %s110
      %p114 = scmp.eq.s32.totalorder %s32, 0
      %p115 = por %p113, %p114
      %p116 = scmp.ne.s32.totalorder %s108, %s110
      %p117 = scmp.eq.s32.totalorder %s37, 1
      %p118 = por %p116, %p117
      %p119 = scmp.ne.s32.totalorder %s110, %s111
      %p120 = scmp.eq.s32.totalorder %s37, 0
      %p121 = por %p119, %p120
      %p122 = scmp.ne.s32.totalorder %s110, %s111
      %p123 = scmp.eq.s32.totalorder %s38, 1
      %p124 = por %p122, %p123
      %p126 = scmp.ne.s32.totalorder %s111, %s125
      %p127 = scmp.eq.s32.totalorder %s38, 0
      %p128 = por %p126, %p127
      %s130 = sadd.s32 %s129, 1
      %p133 = scmp.eq.s32.totalorder %s32, 1
      %p134 = scmp.ne.s32.totalorder %s129, %s131
      %p135 = scmp.eq.s32.totalorder %s32, 0
      %p136 = por %p134, %p135
      %p137 = scmp.ne.s32.totalorder %s129, %s131
      %p138 = scmp.eq.s32.totalorder %s37, 1
      %p139 = por %p137, %p138
      %p140 = scmp.ne.s32.totalorder %s131, %s132
      %p141 = scmp.eq.s32.totalorder %s37, 0
      %p142 = por %p140, %p141
      %p143 = scmp.ne.s32.totalorder %s131, %s132
      %p144 = scmp.eq.s32.totalorder %s38, 1
      %p145 = por %p143, %p144
      %p147 = scmp.ne.s32.totalorder %s132, %s146
      %p148 = scmp.eq.s32.totalorder %s38, 0
      %p149 = por %p147, %p148
      %s151 = sadd.s32 %s150, 1
      %p154 = scmp.eq.s32.totalorder %s32, 1
      %p155 = scmp.ne.s32.totalorder %s150, %s152
      %p156 = scmp.eq.s32.totalorder %s32, 0
      %p157 = por %p155, %p156
      %p158 = scmp.ne.s32.totalorder %s150, %s152
      %p159 = scmp.eq.s32.totalorder %s37, 1
      %p160 = por %p158, %p159
      %p161 = scmp.ne.s32.totalorder %s152, %s153
      %p162 = scmp.eq.s32.totalorder %s37, 0
      %p163 = por %p161, %p162
      %p164 = scmp.ne.s32.totalorder %s152, %s153
      %p165 = scmp.eq.s32.totalorder %s38, 1
      %p166 = por %p164, %p165
      %p168 = scmp.ne.s32.totalorder %s153, %s167
      %p169 = scmp.eq.s32.totalorder %s38, 0
      %p170 = por %p168, %p169
      %s172 = sadd.s32 %s171, 1
      %p175 = scmp.eq.s32.totalorder %s32, 1
      %p176 = scmp.ne.s32.totalorder %s171, %s173
      %p177 = scmp.eq.s32.totalorder %s32, 0
      %p178 = por %p176, %p177
      %p179 = scmp.ne.s32.totalorder %s171, %s173
      %p180 = scmp.eq.s32.totalorder %s37, 1
      %p181 = por %p179, %p180
      %p182 = scmp.ne.s32.totalorder %s173, %s174
      %p183 = scmp.eq.s32.totalorder %s37, 0
      %p184 = por %p182, %p183
      %p185 = scmp.ne.s32.totalorder %s173, %s174
      %p186 = scmp.eq.s32.totalorder %s38, 1
      %p187 = por %p185, %p186
      %p189 = scmp.ne.s32.totalorder %s174, %s188
      %p190 = scmp.eq.s32.totalorder %s38, 0
      %p191 = por %p189, %p190
      %s193 = sadd.s32 %s192, 1
      %p196 = scmp.eq.s32.totalorder %s32, 1
      %p197 = scmp.ne.s32.totalorder %s192, %s194
      %p198 = scmp.eq.s32.totalorder %s32, 0
      %p199 = por %p197, %p198
      %p200 = scmp.ne.s32.totalorder %s192, %s194
      %p201 = scmp.eq.s32.totalorder %s37, 1
      %p202 = por %p200, %p201
      %p203 = scmp.ne.s32.totalorder %s194, %s195
      %p204 = scmp.eq.s32.totalorder %s37, 0
      %p205 = por %p203, %p204
      %p206 = scmp.ne.s32.totalorder %s194, %s195
      %p207 = scmp.eq.s32.totalorder %s38, 1
      %p208 = por %p206, %p207
      %p210 = scmp.ne.s32.totalorder %s195, %s209
      %p211 = scmp.eq.s32.totalorder %s38, 0
      %p212 = por %p210, %p211
      %s214 = sadd.s32 %s213, 1
      %p217 = scmp.eq.s32.totalorder %s32, 1
      %p218 = scmp.ne.s32.totalorder %s213, %s215
      %p219 = scmp.eq.s32.totalorder %s32, 0
      %p220 = por %p218, %p219
      %p221 = scmp.ne.s32.totalorder %s213, %s215
      %p222 = scmp.eq.s32.totalorder %s37, 1
      %p223 = por %p221, %p222
      %p224 = scmp.ne.s32.totalorder %s215, %s216
      %p225 = scmp.eq.s32.totalorder %s37, 0
      %p226 = por %p224, %p225
      %p227 = scmp.ne.s32.totalorder %s215, %s216
      %p228 = scmp.eq.s32.totalorder %s38, 1
      %p229 = por %p227, %p228
      %p231 = scmp.ne.s32.totalorder %s216, %s230
      %p232 = scmp.eq.s32.totalorder %s38, 0
      %p233 = por %p231, %p232
      %s235 = sadd.s32 %s234, 1
      %p238 = scmp.eq.s32.totalorder %s32, 1
      %p239 = scmp.ne.s32.totalorder %s234, %s236
      %p240 = scmp.eq.s32.totalorder %s32, 0
      %p241 = por %p239, %p240
      %p242 = scmp.ne.s32.totalorder %s234, %s236
      %p243 = scmp.eq.s32.totalorder %s37, 1
      %p244 = por %p242, %p243
      %p245 = scmp.ne.s32.totalorder %s236, %s237
      %p246 = scmp.eq.s32.totalorder %s37, 0
      %p247 = por %p245, %p246
      %p248 = scmp.ne.s32.totalorder %s236, %s237
      %p249 = scmp.eq.s32.totalorder %s38, 1
      %p250 = por %p248, %p249
      %p252 = scmp.ne.s32.totalorder %s237, %s251
      %p253 = scmp.eq.s32.totalorder %s38, 0
      %p254 = por %p252, %p253
      %s256 = sadd.s32 %s255, 1
      %p259 = scmp.eq.s32.totalorder %s32, 1
      %p260 = scmp.ne.s32.totalorder %s255, %s257
      %p261 = scmp.eq.s32.totalorder %s32, 0
      %p262 = por %p260, %p261
      %p263 = scmp.ne.s32.totalorder %s255, %s257
      %p264 = scmp.eq.s32.totalorder %s37, 1
      %p265 = por %p263, %p264
      %p266 = scmp.ne.s32.totalorder %s257, %s258
      %p267 = scmp.eq.s32.totalorder %s37, 0
      %p268 = por %p266, %p267
      %p269 = scmp.ne.s32.totalorder %s257, %s258
      %p270 = scmp.eq.s32.totalorder %s38, 1
      %p271 = por %p269, %p270
      %p273 = scmp.ne.s32.totalorder %s258, %s272
      %p274 = scmp.eq.s32.totalorder %s38, 0
      %p275 = por %p273, %p274
      %s277 = sadd.s32 %s276, 1
      %p280 = scmp.eq.s32.totalorder %s32, 1
      %p281 = scmp.ne.s32.totalorder %s276, %s278
      %p282 = scmp.eq.s32.totalorder %s32, 0
      %p283 = por %p281, %p282
      %p284 = scmp.ne.s32.totalorder %s276, %s278
      %p285 = scmp.eq.s32.totalorder %s37, 1
      %p286 = por %p284, %p285
      %p287 = scmp.ne.s32.totalorder %s278, %s279
      %p288 = scmp.eq.s32.totalorder %s37, 0
      %p289 = por %p287, %p288
      %p290 = scmp.ne.s32.totalorder %s278, %s279
      %p291 = scmp.eq.s32.totalorder %s38, 1
      %p292 = por %p290, %p291
      %p294 = scmp.ne.s32.totalorder %s279, %s293
      %p295 = scmp.eq.s32.totalorder %s38, 0
      %p296 = por %p294, %p295
      %s298 = sadd.s32 %s297, 1
      %p301 = scmp.eq.s32.totalorder %s32, 1
      %p302 = scmp.ne.s32.totalorder %s297, %s299
      %p303 = scmp.eq.s32.totalorder %s32, 0
      %p304 = por %p302, %p303
      %p305 = scmp.ne.s32.totalorder %s297, %s299
      %p306 = scmp.eq.s32.totalorder %s37, 1
      %p307 = por %p305, %p306
      %p308 = scmp.ne.s32.totalorder %s299, %s300
      %p309 = scmp.eq.s32.totalorder %s37, 0
      %p310 = por %p308, %p309
      %p311 = scmp.ne.s32.totalorder %s299, %s300
      %p312 = scmp.eq.s32.totalorder %s38, 1
      %p313 = por %p311, %p312
      %p315 = scmp.ne.s32.totalorder %s300, %s314
      %p316 = scmp.eq.s32.totalorder %s38, 0
      %p317 = por %p315, %p316
      %s319 = sadd.s32 %s318, 1
      %p322 = scmp.eq.s32.totalorder %s32, 1
      %p323 = scmp.ne.s32.totalorder %s318, %s320
      %p324 = scmp.eq.s32.totalorder %s32, 0
      %p325 = por %p323, %p324
      %p326 = scmp.ne.s32.totalorder %s318, %s320
      %p327 = scmp.eq.s32.totalorder %s37, 1
      %p328 = por %p326, %p327
      %p329 = scmp.ne.s32.totalorder %s320, %s321
      %p330 = scmp.eq.s32.totalorder %s37, 0
      %p331 = por %p329, %p330
      %p332 = scmp.ne.s32.totalorder %s320, %s321
      %p333 = scmp.eq.s32.totalorder %s38, 1
      %p334 = por %p332, %p333
      %p336 = scmp.ne.s32.totalorder %s321, %s335
      %p337 = scmp.eq.s32.totalorder %s38, 0
      %p338 = por %p336, %p337
      %s340 = sadd.s32 %s339, 1
      %p343 = scmp.eq.s32.totalorder %s32, 1
      %p344 = scmp.ne.s32.totalorder %s339, %s341
      %p345 = scmp.eq.s32.totalorder %s32, 0
      %p346 = por %p344, %p345
      %p347 = scmp.ne.s32.totalorder %s339, %s341
      %p348 = scmp.eq.s32.totalorder %s37, 1
      %p349 = por %p347, %p348
      %p350 = scmp.ne.s32.totalorder %s341, %s342
      %p351 = scmp.eq.s32.totalorder %s37, 0
      %p352 = por %p350, %p351
      %p353 = scmp.ne.s32.totalorder %s341, %s342
      %p354 = scmp.eq.s32.totalorder %s38, 1
      %p355 = por %p353, %p354
      %p357 = scmp.ne.s32.totalorder %s342, %s356
      %p358 = scmp.eq.s32.totalorder %s38, 0
      %p359 = por %p357, %p358
      %s361 = sadd.s32 %s360, 1
      %p364 = scmp.eq.s32.totalorder %s32, 1
      %p365 = scmp.ne.s32.totalorder %s360, %s362
      %p366 = scmp.eq.s32.totalorder %s32, 0
      %p367 = por %p365, %p366
      %p368 = scmp.ne.s32.totalorder %s360, %s362
      %p369 = scmp.eq.s32.totalorder %s37, 1
      %p370 = por %p368, %p369
      %p371 = scmp.ne.s32.totalorder %s362, %s363
      %p372 = scmp.eq.s32.totalorder %s37, 0
      %p373 = por %p371, %p372
      %p374 = scmp.ne.s32.totalorder %s362, %s363
      %p375 = scmp.eq.s32.totalorder %s38, 1
      %p376 = por %p374, %p375
      %p378 = scmp.ne.s32.totalorder %s363, %s377
      %p379 = scmp.eq.s32.totalorder %s38, 0
      %p380 = por %p378, %p379
      %s382 = sadd.s32 %s381, 1
      %p385 = scmp.eq.s32.totalorder %s32, 1
      %p386 = scmp.ne.s32.totalorder %s381, %s383
      %p387 = scmp.eq.s32.totalorder %s32, 0
      %p388 = por %p386, %p387
      %p389 = scmp.ne.s32.totalorder %s381, %s383
      %p390 = scmp.eq.s32.totalorder %s37, 1
      %p391 = por %p389, %p390
      %p392 = scmp.ne.s32.totalorder %s383, %s384
      %p393 = scmp.eq.s32.totalorder %s37, 0
      %p394 = por %p392, %p393
      %p395 = scmp.ne.s32.totalorder %s383, %s384
      %p396 = scmp.eq.s32.totalorder %s38, 1
      %p397 = por %p395, %p396
      %p399 = scmp.ne.s32.totalorder %s384, %s398
      %p400 = scmp.eq.s32.totalorder %s38, 0
      %p401 = por %p399, %p400
      %s403 = sadd.s32 %s402, 1
      %p406 = scmp.eq.s32.totalorder %s32, 1
      %p407 = scmp.ne.s32.totalorder %s402, %s404
      %p408 = scmp.eq.s32.totalorder %s32, 0
      %p409 = por %p407, %p408
      %p410 = scmp.ne.s32.totalorder %s402, %s404
      %p411 = scmp.eq.s32.totalorder %s37, 1
      %p412 = por %p410, %p411
      %p413 = scmp.ne.s32.totalorder %s404, %s405
      %p414 = scmp.eq.s32.totalorder %s37, 0
      %p415 = por %p413, %p414
      %p416 = scmp.ne.s32.totalorder %s404, %s405
      %p417 = scmp.eq.s32.totalorder %s38, 1
      %p418 = por %p416, %p417
      %p420 = scmp.ne.s32.totalorder %s405, %s419
      %p421 = scmp.eq.s32.totalorder %s38, 0
      %p422 = por %p420, %p421
      %s424 = sadd.s32 %s423, 1
      %p427 = scmp.eq.s32.totalorder %s32, 1
      %p428 = scmp.ne.s32.totalorder %s423, %s425
      %p429 = scmp.eq.s32.totalorder %s32, 0
      %p430 = por %p428, %p429
      %p431 = scmp.ne.s32.totalorder %s423, %s425
      %p432 = scmp.eq.s32.totalorder %s37, 1
      %p433 = por %p431, %p432
      %p434 = scmp.ne.s32.totalorder %s425, %s426
      %p435 = scmp.eq.s32.totalorder %s37, 0
      %p436 = por %p434, %p435
      %p437 = scmp.ne.s32.totalorder %s425, %s426
      %p438 = scmp.eq.s32.totalorder %s38, 1
      %p439 = por %p437, %p438
      %p441 = scmp.ne.s32.totalorder %s426, %s440
      %p442 = scmp.eq.s32.totalorder %s38, 0
      %p443 = por %p441, %p442
      %s445 = sadd.s32 %s444, 1
      %p448 = scmp.eq.s32.totalorder %s32, 1
      %p449 = scmp.ne.s32.totalorder %s444, %s446
      %p450 = scmp.eq.s32.totalorder %s32, 0
      %p451 = por %p449, %p450
      %p452 = scmp.ne.s32.totalorder %s444, %s446
      %p453 = scmp.eq.s32.totalorder %s37, 1
      %p454 = por %p452, %p453
      %p455 = scmp.ne.s32.totalorder %s446, %s447
      %p456 = scmp.eq.s32.totalorder %s37, 0
      %p457 = por %p455, %p456
      %p458 = scmp.ne.s32.totalorder %s446, %s447
      %p459 = scmp.eq.s32.totalorder %s38, 1
      %p460 = por %p458, %p459
      %p462 = scmp.ne.s32.totalorder %s447, %s461
      %p463 = scmp.eq.s32.totalorder %s38, 0
      %p464 = por %p462, %p463
      %s465 = ssub.s32 %s32, %s39
      %p466 = scmp.eq.s32.totalorder %s465, 0
      %s468 = sadd.s32 %s467, 1
      %s469 = scalar_select %p466, %s467, %s468
      %p472 = pneg %p466
      %p473 = scmp.eq.s32.totalorder %s32, 1
      %p474 = por %p472, %p473
      %p475 = scmp.ne.s32.totalorder %s467, %s470
      %p476 = scmp.eq.s32.totalorder %s32, 0
      %p477 = por %p475, %p476
      %p478 = scmp.ne.s32.totalorder %s467, %s470
      %p479 = scmp.eq.s32.totalorder %s37, 1
      %p480 = por %p478, %p479
      %p481 = scmp.ne.s32.totalorder %s470, %s471
      %p482 = scmp.eq.s32.totalorder %s37, 0
      %p483 = por %p481, %p482
      %p484 = scmp.ne.s32.totalorder %s470, %s471
      %p485 = scmp.eq.s32.totalorder %s38, 1
      %p486 = por %p484, %p485
      %p488 = scmp.ne.s32.totalorder %s471, %s487
      %p489 = scmp.eq.s32.totalorder %s38, 0
      %p490 = por %p488, %p489
      %p491 = scmp.le.s32.totalorder 1, %s32
      %p492 = scmp.lt.s32.totalorder %s32, 3
      %p493 = pnand %p491, %p492
      %p494 = pneg %p493
      // Predicated region
      $region9: #{_lambda_.1} parent=5 // pred_check
        _
      $region10: #{_lambda_.1} parent=5 // pred_check_branch
        %496 = sbr.rel (%p493) target = $region12
      $region11: #{_lambda_.1} parent=5 // pred_region
        %s497 = ssub.s32 %s32, 1
        // Predicated region
        $region13: #{_lambda_.1} parent=11 // pred_check
          %p498 = pneg %p79
        $region14: #{_lambda_.1} parent=11 // pred_check_branch
          %500 = sbr.rel (%p498) target = $region16
        $region15: #{_lambda_.1} parent=11 // pred_region
          %s502 = ssub.s32 512, 512
          %503 = vsyncadd [#allocation5], %s502
          %s504 = sshll.u32 [#allocation4], 4
          %s505 = int_to_ptr.vmem [resolvable:$true] %s504
          %510 = dma.hbm_to_vmem [thread:$0]  %s1, 512, %s505, [#allocation5], 128, 128, 8
        $region16: #{_lambda_.1} parent=11 // pred_fallthru
          _
        // Predicated region
        $region17: #{_lambda_.1} parent=11 // pred_check
          %p511 = pneg %p100
        $region18: #{_lambda_.1} parent=11 // pred_check_branch
          %513 = sbr.rel (%p511) target = $region20
        $region19: #{_lambda_.1} parent=11 // pred_region
          _
        $region20: #{_lambda_.1} parent=11 // pred_fallthru
          _
        // Predicated region
        $region21: #{_lambda_.1} parent=11 // pred_check
          %p514 = pneg %p121
        $region22: #{_lambda_.1} parent=11 // pred_check_branch
          %516 = sbr.rel (%p514) target = $region24
        $region23: #{_lambda_.1} parent=11 // pred_region
          %s518 = ssub.s32 512, 512
          %519 = vsyncadd [#allocation5], %s518
          %s520 = sshll.u32 [#allocation6], 4
          %s521 = int_to_ptr.vmem [resolvable:$true] %s520
          %526 = dma.hbm_to_vmem [thread:$0]  %s3, 512, %s521, [#allocation5], 128, 128, 8
        $region24: #{_lambda_.1} parent=11 // pred_fallthru
          _
        // Predicated region
        $region25: #{_lambda_.1} parent=11 // pred_check
          %p527 = pneg %p142
        $region26: #{_lambda_.1} parent=11 // pred_check_branch
          %529 = sbr.rel (%p527) target = $region28
        $region27: #{_lambda_.1} parent=11 // pred_region
          _
        $region28: #{_lambda_.1} parent=11 // pred_fallthru
          _
        // Predicated region
        $region29: #{_lambda_.1} parent=11 // pred_check
          %p530 = pneg %p163
        $region30: #{_lambda_.1} parent=11 // pred_check_branch
          %532 = sbr.rel (%p530) target = $region32
        $region31: #{_lambda_.1} parent=11 // pred_region
          _
        $region32: #{_lambda_.1} parent=11 // pred_fallthru
          _
        // Predicated region
        $region33: #{_lambda_.1} parent=11 // pred_check
          %p533 = pneg %p184
        $region34: #{_lambda_.1} parent=11 // pred_check_branch
          %535 = sbr.rel (%p533) target = $region36
        $region35: #{_lambda_.1} parent=11 // pred_region
          %s537 = ssub.s32 96, 96
          %538 = vsyncadd [#allocation8], %s537
          %s540 = sshll.u32 [#allocation7], 4
          %s541 = int_to_ptr.vmem [resolvable:$true] %s540
          %543 = dma.hbm_to_vmem [thread:$0]  %s6, 96, %s541, [#allocation8]
        $region36: #{_lambda_.1} parent=11 // pred_fallthru
          _
        // Predicated region
        $region37: #{_lambda_.1} parent=11 // pred_check
          %p544 = pneg %p205
        $region38: #{_lambda_.1} parent=11 // pred_check_branch
          %546 = sbr.rel (%p544) target = $region40
        $region39: #{_lambda_.1} parent=11 // pred_region
          %s548 = ssub.s32 256, 256
          %549 = vsyncadd [#allocation8], %s548
          %s550 = sshll.u32 [#allocation9], 4
          %s551 = int_to_ptr.vmem [resolvable:$true] %s550
          %556 = dma.hbm_to_vmem [thread:$0]  %s7, 256, %s551, [#allocation8], 128, 128, 8
        $region40: #{_lambda_.1} parent=11 // pred_fallthru
          _
        // Predicated region
        $region41: #{_lambda_.1} parent=11 // pred_check
          %p557 = pneg %p226
        $region42: #{_lambda_.1} parent=11 // pred_check_branch
          %559 = sbr.rel (%p557) target = $region44
        $region43: #{_lambda_.1} parent=11 // pred_region
          %s561 = ssub.s32 256, 256
          %562 = vsyncadd [#allocation11], %s561
          %s563 = sshll.u32 [#allocation10], 4
          %s564 = int_to_ptr.vmem [resolvable:$true] %s563
          %569 = dma.hbm_to_vmem [thread:$0]  %s8, 256, %s564, [#allocation11], 128, 128, 8
        $region44: #{_lambda_.1} parent=11 // pred_fallthru
          _
        // Predicated region
        $region45: #{_lambda_.1} parent=11 // pred_check
          %p570 = pneg %p247
        $region46: #{_lambda_.1} parent=11 // pred_check_branch
          %572 = sbr.rel (%p570) target = $region48
        $region47: #{_lambda_.1} parent=11 // pred_region
          _
        $region48: #{_lambda_.1} parent=11 // pred_fallthru
          _
        // Predicated region
        $region49: #{_lambda_.1} parent=11 // pred_check
          %p573 = pneg %p268
        $region50: #{_lambda_.1} parent=11 // pred_check_branch
          %575 = sbr.rel (%p573) target = $region52
        $region51: #{_lambda_.1} parent=11 // pred_region
          _
        $region52: #{_lambda_.1} parent=11 // pred_fallthru
          _
        // Predicated region
        $region53: #{_lambda_.1} parent=11 // pred_check
          %p576 = pneg %p289
        $region54: #{_lambda_.1} parent=11 // pred_check_branch
          %578 = sbr.rel (%p576) target = $region56
        $region55: #{_lambda_.1} parent=11 // pred_region
          _
        $region56: #{_lambda_.1} parent=11 // pred_fallthru
          _
        // Predicated region
        $region57: #{_lambda_.1} parent=11 // pred_check
          %p579 = pneg %p310
        $region58: #{_lambda_.1} parent=11 // pred_check_branch
          %581 = sbr.rel (%p579) target = $region60
        $region59: #{_lambda_.1} parent=11 // pred_region
          %s583 = ssub.s32 1536, 1536
          %584 = vsyncadd [#allocation11], %s583
          %s585 = sshll.u32 [#allocation12], 4
          %s586 = int_to_ptr.vmem [resolvable:$true] %s585
          %591 = dma.hbm_to_vmem [thread:$0]  %s12, 1536, %s586, [#allocation11], 64, 64, 4
        $region60: #{_lambda_.1} parent=11 // pred_fallthru
          _
        // Predicated region
        $region61: #{_lambda_.1} parent=11 // pred_check
          %p592 = pneg %p331
        $region62: #{_lambda_.1} parent=11 // pred_check_branch
          %594 = sbr.rel (%p592) target = $region64
        $region63: #{_lambda_.1} parent=11 // pred_region
          _
        $region64: #{_lambda_.1} parent=11 // pred_fallthru
          _
        // Predicated region
        $region65: #{_lambda_.1} parent=11 // pred_check
          %p595 = pneg %p352
        $region66: #{_lambda_.1} parent=11 // pred_check_branch
          %597 = sbr.rel (%p595) target = $region68
        $region67: #{_lambda_.1} parent=11 // pred_region
          _
        $region68: #{_lambda_.1} parent=11 // pred_fallthru
          _
        // Predicated region
        $region69: #{_lambda_.1} parent=11 // pred_check
          %p598 = pneg %p373
        $region70: #{_lambda_.1} parent=11 // pred_check_branch
          %600 = sbr.rel (%p598) target = $region72
        $region71: #{_lambda_.1} parent=11 // pred_region
          _
        $region72: #{_lambda_.1} parent=11 // pred_fallthru
          _
        // Predicated region
        $region73: #{_lambda_.1} parent=11 // pred_check
          %p601 = pneg %p394
        $region74: #{_lambda_.1} parent=11 // pred_check_branch
          %603 = sbr.rel (%p601) target = $region76
        $region75: #{_lambda_.1} parent=11 // pred_region
          _
        $region76: #{_lambda_.1} parent=11 // pred_fallthru
          _
        // Predicated region
        $region77: #{_lambda_.1} parent=11 // pred_check
          %p604 = pneg %p415
        $region78: #{_lambda_.1} parent=11 // pred_check_branch
          %606 = sbr.rel (%p604) target = $region80
        $region79: #{_lambda_.1} parent=11 // pred_region
          _
        $region80: #{_lambda_.1} parent=11 // pred_fallthru
          _
        // Predicated region
        $region81: #{_lambda_.1} parent=11 // pred_check
          %p607 = pneg %p436
        $region82: #{_lambda_.1} parent=11 // pred_check_branch
          %609 = sbr.rel (%p607) target = $region84
        $region83: #{_lambda_.1} parent=11 // pred_region
          _
        $region84: #{_lambda_.1} parent=11 // pred_fallthru
          _
        // Predicated region
        $region85: #{_lambda_.1} parent=11 // pred_check
          %p610 = pneg %p457
        $region86: #{_lambda_.1} parent=11 // pred_check_branch
          %612 = sbr.rel (%p610) target = $region88
        $region87: #{_lambda_.1} parent=11 // pred_region
          _
        $region88: #{_lambda_.1} parent=11 // pred_fallthru
          _
      $region12: #{_lambda_.1} parent=5 // pred_fallthru
        _
      %p613 = scmp.lt.s32.totalorder %s32, 2
      // Predicated region
      $region89: #{_lambda_.1} parent=5 // pred_check
        %p614 = pneg %p613
      $region90: #{_lambda_.1} parent=5 // pred_check_branch
        %616 = sbr.rel (%p614) target = $region92
      $region91: #{_lambda_.1} parent=5 // pred_region
        // Predicated region
        $region93: #{_lambda_.1} parent=91 // pred_check
          %p617 = pneg %p52
        $region94: #{_lambda_.1} parent=91 // pred_check_branch
          %619 = sbr.rel (%p617) target = $region96
        $region95: #{_lambda_.1} parent=91 // pred_region
          %s620 = sand.u32 %s42, 1
          %s621 = scalar_lea.sflag [#allocation3], %s620
          %s622 = sand.u32 %s42, 1
          %s623 = smul.addr %s622, 2
          %s624 = scalar_lea.vmem [#allocation2], %s623
          %s626 = ssub.s32 32, 32
          %627 = vsyncadd %s621, %s626
          %s628 = smul.addr %s32, 32
          %s629 = scalar_lea.hbm %s0, %s628
          %s631 = sshll.u32 %s624, 4
          %s632 = int_to_ptr.vmem [resolvable:$true] %s631
          %634 = dma.hbm_to_vmem [thread:$0]  %s629, 32, %s632, %s621
        $region96: #{_lambda_.1} parent=91 // pred_fallthru
          _
      $region92: #{_lambda_.1} parent=5 // pred_fallthru
        _
      %p635 = scmp.le.s32.totalorder 1, %s32
      %p636 = scmp.lt.s32.totalorder %s32, 3
      %p637 = pnand %p635, %p636
      %p638 = pneg %p637
      // Predicated region
      $region97: #{_lambda_.1} parent=5 // pred_check
        _
      $region98: #{_lambda_.1} parent=5 // pred_check_branch
        %640 = sbr.rel (%p637) target = $region100
      $region99: #{_lambda_.1} parent=5 // pred_region
        %s641 = ssub.s32 %s32, 1
        %s642 = sand.u32 %s45, 1
        %s643 = scalar_lea.sflag [#allocation3], %s642
        %s644 = sand.u32 %s45, 1
        %s645 = smul.addr %s644, 2
        %s646 = scalar_lea.vmem [#allocation2], %s645
        // Predicated region
        $region101: #{_lambda_.1} parent=99 // pred_check
          %p647 = pneg %p58
        $region102: #{_lambda_.1} parent=99 // pred_check_branch
          %649 = sbr.rel (%p647) target = $region104
        $region103: #{_lambda_.1} parent=99 // pred_region
          %650 = dma.done %s643, 32
        $region104: #{_lambda_.1} parent=99 // pred_fallthru
          _
        // Predicated region
        $region105: #{_lambda_.1} parent=99 // pred_check
          %p651 = pneg %p79
        $region106: #{_lambda_.1} parent=99 // pred_check_branch
          %653 = sbr.rel (%p651) target = $region108
        $region107: #{_lambda_.1} parent=99 // pred_region
          %654 = dma.done [#allocation5], 512
        $region108: #{_lambda_.1} parent=99 // pred_fallthru
          _
        // Predicated region
        $region109: #{_lambda_.1} parent=99 // pred_check
          %p655 = pneg %p121
        $region110: #{_lambda_.1} parent=99 // pred_check_branch
          %657 = sbr.rel (%p655) target = $region112
        $region111: #{_lambda_.1} parent=99 // pred_region
          %658 = dma.done [#allocation5], 512
        $region112: #{_lambda_.1} parent=99 // pred_fallthru
          _
        // Predicated region
        $region113: #{_lambda_.1} parent=99 // pred_check
          %p659 = pneg %p184
        $region114: #{_lambda_.1} parent=99 // pred_check_branch
          %661 = sbr.rel (%p659) target = $region116
        $region115: #{_lambda_.1} parent=99 // pred_region
          %662 = dma.done [#allocation8], 96
        $region116: #{_lambda_.1} parent=99 // pred_fallthru
          _
        // Predicated region
        $region117: #{_lambda_.1} parent=99 // pred_check
          %p663 = pneg %p205
        $region118: #{_lambda_.1} parent=99 // pred_check_branch
          %665 = sbr.rel (%p663) target = $region120
        $region119: #{_lambda_.1} parent=99 // pred_region
          %666 = dma.done [#allocation8], 256
        $region120: #{_lambda_.1} parent=99 // pred_fallthru
          _
        // Predicated region
        $region121: #{_lambda_.1} parent=99 // pred_check
          %p667 = pneg %p226
        $region122: #{_lambda_.1} parent=99 // pred_check_branch
          %669 = sbr.rel (%p667) target = $region124
        $region123: #{_lambda_.1} parent=99 // pred_region
          %670 = dma.done [#allocation11], 256
        $region124: #{_lambda_.1} parent=99 // pred_fallthru
          _
        // Predicated region
        $region125: #{_lambda_.1} parent=99 // pred_check
          %p671 = pneg %p310
        $region126: #{_lambda_.1} parent=99 // pred_check_branch
          %673 = sbr.rel (%p671) target = $region128
        $region127: #{_lambda_.1} parent=99 // pred_region
          %674 = dma.done [#allocation11], 1536
        $region128: #{_lambda_.1} parent=99 // pred_fallthru
          _
        %s675 = sand.u32 %s45, 1
        %s676 = scalar_lea.sflag [#allocation3], %s675
        %s677 = sand.u32 %s45, 1
        %s678 = smul.addr %s677, 2
        %s679 = scalar_lea.vmem [#allocation2], %s678
        %p680 = pneg %p58
        %p681 = pneg %p55
        %p682 = pneg %p79
        %p683 = pneg %p76
        %p684 = pneg %p100
        %p685 = pneg %p97
        %p686 = pneg %p121
        %p687 = pneg %p118
        %p688 = pneg %p142
        %p689 = pneg %p139
        %p690 = pneg %p163
        %p691 = pneg %p160
        %p692 = pneg %p184
        %p693 = pneg %p181
        %p694 = pneg %p205
        %p695 = pneg %p202
        %p696 = pneg %p226
        %p697 = pneg %p223
        %p698 = pneg %p247
        %p699 = pneg %p244
        %p700 = pneg %p268
        %p701 = pneg %p265
        %p702 = pneg %p289
        %p703 = pneg %p286
        %p704 = pneg %p310
        %p705 = pneg %p307
        %p706 = pneg %p331
        %p707 = pneg %p328
        %p708 = pneg %p352
        %p709 = pneg %p349
        %p710 = pneg %p373
        %p711 = pneg %p370
        %p712 = pneg %p394
        %p713 = pneg %p391
        %p714 = pneg %p415
        %p715 = pneg %p412
        %p716 = pneg %p436
        %p717 = pneg %p433
        %p718 = pneg %p457
        %p719 = pneg %p454
        %p720 = pneg %p483
        %p721 = pneg %p480
        %s722 = smul.u32 2, %s37
        %p723 = scmp.lt.s32.totalorder %s722, 3
        %s724 = scalar_select %p723, %s722, 3
        %s725 = smul.addr %s724, 8
        %s726 = scalar_lea.vmem %s20, %s725
        %s727 = smul.u32 2, %s37
        %p728 = scmp.lt.s32.totalorder %s727, 3
        %s729 = scalar_select %p728, %s727, 3
        %s730 = smul.addr %s729, 8
        %s731 = scalar_lea.vmem %s20, %s730
        %s732 = smul.u32 2, %s37
        %v734 = vld [vmem:[%s646] sm:$0x3]
        %v735 = vmul.f32 %v734, %v734
        %vm736 = vcmask 254976
        %v737 = vsel %vm736, %v735, 0.0
        %738 = vadd.xlane.f32.xlu0 %v737
        %v739 = vpop.xlane.xlu0 %738
        %v740 = vrcp.pop 32.0
        %v741 = vmul.f32 %v739, %v740
        %v742 = vadd.f32 %v741, 1e-08
        %v743 = vrsqrt.pop %v742
        %v744 = vmul.f32 %v734, %v743
        %v745 = vld [vmem:[#allocation4] sm:$0xff]
        %v746 = vld [vmem:[#allocation4 + $0x8] sm:$0xff]
        %v747 = vld [vmem:[#allocation4 + $0x10] sm:$0xff]
        %v748 = vld [vmem:[#allocation4 + $0x18] sm:$0xff]
        %v749 = vld [vmem:[%s2] sm:$0x1]
        %v751 = vlaneseq
        %v752 = vshrl.u32 %v751, 7
        %v753 = vsub.s32 0, %v752
        %v754 = vrot.slane %v749, %v753
        %vm756 = vcmask 261120
        %v758 = vsel %vm756, %v744, 0
        %760 = vmatprep.subr.mxu0 0.0
        %761 = vmatpush1.msra.mxu0 0.0
        %762 = vmatprep.subr.mxu0 0.0
        %763 = vmatpush1.msra.mxu0 0.0
        %764 = vmatprep.subr.mxu0 0.0
        %765 = vmatpush1.msra.mxu0 0.0
        %766 = vmatprep.subr.mxu0 0.0
        %767 = vmatpush1.msra.mxu0 0.0
        %768 = vmatprep.subr.mxu0 0.0
        %769 = vmatpush1.msra.mxu0 0.0
        %770 = vmatprep.subr.mxu0 0.0
        %771 = vmatpush1.msra.mxu0 0.0
        %772 = vmatprep.subr.mxu0 0.0
        %773 = vmatpush1.msra.mxu0 0.0
        %774 = vmatprep.subr.mxu0 0.0
        %775 = vmatpush1.msra.mxu0 0.0
        %776 = vmatprep.subr.mxu0 0.0
        %777 = vmatpush1.msra.mxu0 0.0
        %778 = vmatprep.subr.mxu0 0.0
        %779 = vmatpush1.msra.mxu0 0.0
        %780 = vmatprep.subr.mxu0 0.0
        %781 = vmatpush1.msra.mxu0 0.0
        %782 = vmatprep.subr.mxu0 0.0
        %783 = vmatpush1.msra.mxu0 0.0
        %784 = vmatprep.subr.mxu0 0.0
        %785 = vmatpush1.msra.mxu0 %v748
        %786 = vmatprep.subr.mxu0 0.0
        %787 = vmatpush1.msra.mxu0 %v747
        %788 = vmatprep.subr.mxu0 0.0
        %789 = vmatpush1.msra.mxu0 %v746
        %790 = vmatprep.subr.mxu0 0.0
        %791 = vmatpush1.msra.mxu0 %v745
        %792 = vmatprep.subr.mxu0 0.0
        %793 = vmatpush2.msra.mxu0 0.0
        %794 = vmatprep.subr.mxu0 0.0
        %795 = vmatpush2.msra.mxu0 0.0
        %796 = vmatprep.subr.mxu0 0.0
        %797 = vmatpush2.msra.mxu0 0.0
        %798 = vmatprep.subr.mxu0 0.0
        %799 = vmatpush2.msra.mxu0 0.0
        %800 = vmatprep.subr.mxu0 0.0
        %801 = vmatpush2.msra.mxu0 0.0
        %802 = vmatprep.subr.mxu0 0.0
        %803 = vmatpush2.msra.mxu0 0.0
        %804 = vmatprep.subr.mxu0 0.0
        %805 = vmatpush2.msra.mxu0 0.0
        %806 = vmatprep.subr.mxu0 0.0
        %807 = vmatpush2.msra.mxu0 0.0
        %808 = vmatprep.subr.mxu0 0.0
        %809 = vmatpush2.msra.mxu0 0.0
        %810 = vmatprep.subr.mxu0 0.0
        %811 = vmatpush2.msra.mxu0 0.0
        %812 = vmatprep.subr.mxu0 0.0
        %813 = vmatpush2.msra.mxu0 0.0
        %814 = vmatprep.subr.mxu0 0.0
        %815 = vmatpush2.msra.mxu0 0.0
        %816 = vmatprep.subr.mxu0 0.0
        %817 = vmatpush2.msra.mxu0 0.0
        %818 = vmatprep.subr.mxu0 0.0
        %819 = vmatpush2.msra.mxu0 0.0
        %820 = vmatprep.subr.mxu0 0.0
        %821 = vmatpush2.msra.mxu0 0.0
        %822 = vmatprep.subr.mxu0 0.0
        %823 = vmatpush2.msra.mxu0 0.0
        %824 = vmatprep.mubr.f32.mxu0 0.0
        %825 = vmatmul.mubr.f32.gmra.mxu0 %v758
        %v826 = vpop.f32.mrf.mxu0
        %v827 = vadd.f32 %v754, %v826
        %v828 = vpop.f32.mrf.mxu0
        %829 = vdwg.mxu0
        %vm830 = vcmp.ge.f32.partialorder %v827, 0.0
        %v831 = vmul.f32 %v827, 0.2
        %v832 = vsel %vm830, %v827, %v831
        %v833 = vmul.f32 %v832, 1.4142135
        %v834 = vld [vmem:[#allocation6] sm:$0xff]
        %v835 = vld [vmem:[#allocation6 + $0x8] sm:$0xff]
        %v836 = vld [vmem:[#allocation6 + $0x10] sm:$0xff]
        %v837 = vld [vmem:[#allocation6 + $0x18] sm:$0xff]
        %v838 = vld [vmem:[%s4] sm:$0x1]
        %v840 = vlaneseq
        %v841 = vshrl.u32 %v840, 7
        %v842 = vsub.s32 0, %v841
        %v843 = vrot.slane %v838, %v842
        %v846 = vsel %vm756, %v833, 0
        %848 = vmatprep.subr.mxu0 0.0
        %849 = vmatpush1.msra.mxu0 0.0
        %850 = vmatprep.subr.mxu0 0.0
        %851 = vmatpush1.msra.mxu0 0.0
        %852 = vmatprep.subr.mxu0 0.0
        %853 = vmatpush1.msra.mxu0 0.0
        %854 = vmatprep.subr.mxu0 0.0
        %855 = vmatpush1.msra.mxu0 0.0
        %856 = vmatprep.subr.mxu0 0.0
        %857 = vmatpush1.msra.mxu0 0.0
        %858 = vmatprep.subr.mxu0 0.0
        %859 = vmatpush1.msra.mxu0 0.0
        %860 = vmatprep.subr.mxu0 0.0
        %861 = vmatpush1.msra.mxu0 0.0
        %862 = vmatprep.subr.mxu0 0.0
        %863 = vmatpush1.msra.mxu0 0.0
        %864 = vmatprep.subr.mxu0 0.0
        %865 = vmatpush1.msra.mxu0 0.0
        %866 = vmatprep.subr.mxu0 0.0
        %867 = vmatpush1.msra.mxu0 0.0
        %868 = vmatprep.subr.mxu0 0.0
        %869 = vmatpush1.msra.mxu0 0.0
        %870 = vmatprep.subr.mxu0 0.0
        %871 = vmatpush1.msra.mxu0 0.0
        %872 = vmatprep.subr.mxu0 0.0
        %873 = vmatpush1.msra.mxu0 %v837
        %874 = vmatprep.subr.mxu0 0.0
        %875 = vmatpush1.msra.mxu0 %v836
        %876 = vmatprep.subr.mxu0 0.0
        %877 = vmatpush1.msra.mxu0 %v835
        %878 = vmatprep.subr.mxu0 0.0
        %879 = vmatpush1.msra.mxu0 %v834
        %880 = vmatprep.subr.mxu0 0.0
        %881 = vmatpush2.msra.mxu0 0.0
        %882 = vmatprep.subr.mxu0 0.0
        %883 = vmatpush2.msra.mxu0 0.0
        %884 = vmatprep.subr.mxu0 0.0
        %885 = vmatpush2.msra.mxu0 0.0
        %886 = vmatprep.subr.mxu0 0.0
        %887 = vmatpush2.msra.mxu0 0.0
        %888 = vmatprep.subr.mxu0 0.0
        %889 = vmatpush2.msra.mxu0 0.0
        %890 = vmatprep.subr.mxu0 0.0
        %891 = vmatpush2.msra.mxu0 0.0
        %892 = vmatprep.subr.mxu0 0.0
        %893 = vmatpush2.msra.mxu0 0.0
        %894 = vmatprep.subr.mxu0 0.0
        %895 = vmatpush2.msra.mxu0 0.0
        %896 = vmatprep.subr.mxu0 0.0
        %897 = vmatpush2.msra.mxu0 0.0
        %898 = vmatprep.subr.mxu0 0.0
        %899 = vmatpush2.msra.mxu0 0.0
        %900 = vmatprep.subr.mxu0 0.0
        %901 = vmatpush2.msra.mxu0 0.0
        %902 = vmatprep.subr.mxu0 0.0
        %903 = vmatpush2.msra.mxu0 0.0
        %904 = vmatprep.subr.mxu0 0.0
        %905 = vmatpush2.msra.mxu0 0.0
        %906 = vmatprep.subr.mxu0 0.0
        %907 = vmatpush2.msra.mxu0 0.0
        %908 = vmatprep.subr.mxu0 0.0
        %909 = vmatpush2.msra.mxu0 0.0
        %910 = vmatprep.subr.mxu0 0.0
        %911 = vmatpush2.msra.mxu0 0.0
        %912 = vmatprep.mubr.f32.mxu0 0.0
        %913 = vmatmul.mubr.f32.gmra.mxu0 %v846
        %v914 = vpop.f32.mrf.mxu0
        %v915 = vadd.f32 %v843, %v914
        %v916 = vpop.f32.mrf.mxu0
        %917 = vdwg.mxu0
        %vm918 = vcmp.ge.f32.partialorder %v915, 0.0
        %v919 = vmul.f32 %v915, 0.2
        %v920 = vsel %vm918, %v915, %v919
        %v921 = vmul.f32 %v920, 1.4142135
        %v922 = vld [vmem:[%s5] sm:$0xff]
        %v923 = vld [vmem:[%s5 + $0x8] sm:$0xff]
        %v924 = vld [vmem:[%s5 + $0x10] sm:$0xff]
        %v925 = vld [vmem:[%s5 + $0x18] sm:$0xff]
        %v926 = vld [vmem:[%s5 + $0x20] sm:$0xff]
        %v927 = vld [vmem:[%s5 + $0x28] sm:$0xff]
        %v928 = vld [vmem:[%s5 + $0x30] sm:$0xff]
        %v929 = vld [vmem:[%s5 + $0x38] sm:$0xff]
        %v930 = vld [vmem:[%s5 + $0x40] sm:$0xff]
        %v931 = vld [vmem:[%s5 + $0x48] sm:$0xff]
        %v932 = vld [vmem:[%s5 + $0x50] sm:$0xff]
        %v933 = vld [vmem:[%s5 + $0x58] sm:$0xff]
        %v934 = vld [vmem:[%s5 + $0x60] sm:$0xff]
        %v935 = vld [vmem:[%s5 + $0x68] sm:$0xff]
        %v936 = vld [vmem:[%s5 + $0x70] sm:$0xff]
        %v937 = vld [vmem:[%s5 + $0x78] sm:$0xff]
        %v938 = vld [vmem:[%s5 + $0x80] sm:$0xff]
        %v939 = vld [vmem:[%s5 + $0x88] sm:$0xff]
        %v940 = vld [vmem:[%s5 + $0x90] sm:$0xff]
        %v941 = vld [vmem:[%s5 + $0x98] sm:$0xff]
        %v942 = vld [vmem:[%s5 + $0xa0] sm:$0xff]
        %v943 = vld [vmem:[%s5 + $0xa8] sm:$0xff]
        %v944 = vld [vmem:[%s5 + $0xb0] sm:$0xff]
        %v945 = vld [vmem:[%s5 + $0xb8] sm:$0xff]
        %v946 = vld [vmem:[#allocation7] sm:$0x3f]
        %v948 = vlaneseq
        %v949 = vshrl.u32 %v948, 7
        %v950 = vsub.s32 0, %v949
        %v951 = vrot.slane %v946, %v950
        %v952 = vlaneseq
        %v953 = vshrl.u32 %v952, 7
        %v954 = vsub.s32 1, %v953
        %v955 = vrot.slane %v946, %v954
        %v956 = vlaneseq
        %v957 = vshrl.u32 %v956, 7
        %v958 = vsub.s32 2, %v957
        %v959 = vrot.slane %v946, %v958
        %v960 = vlaneseq
        %v961 = vshrl.u32 %v960, 7
        %v962 = vsub.s32 3, %v961
        %v963 = vrot.slane %v946, %v962
        %v964 = vlaneseq
        %v965 = vshrl.u32 %v964, 7
        %v966 = vsub.s32 4, %v965
        %v967 = vrot.slane %v946, %v966
        %v968 = vlaneseq
        %v969 = vshrl.u32 %v968, 7
        %v970 = vsub.s32 5, %v969
        %v971 = vrot.slane %v946, %v970
        %v979 = vsel %vm756, %v921, 0
        %981 = vmatprep.subr.mxu0 0.0
        %982 = vmatpush1.msra.mxu0 0.0
        %983 = vmatprep.subr.mxu0 0.0
        %984 = vmatpush1.msra.mxu0 0.0
        %985 = vmatprep.subr.mxu0 0.0
        %986 = vmatpush1.msra.mxu0 0.0
        %987 = vmatprep.subr.mxu0 0.0
        %988 = vmatpush1.msra.mxu0 0.0
        %989 = vmatprep.subr.mxu0 0.0
        %990 = vmatpush1.msra.mxu0 0.0
        %991 = vmatprep.subr.mxu0 0.0
        %992 = vmatpush1.msra.mxu0 0.0
        %993 = vmatprep.subr.mxu0 0.0
        %994 = vmatpush1.msra.mxu0 0.0
        %995 = vmatprep.subr.mxu0 0.0
        %996 = vmatpush1.msra.mxu0 0.0
        %997 = vmatprep.subr.mxu0 0.0
        %998 = vmatpush1.msra.mxu0 0.0
        %999 = vmatprep.subr.mxu0 0.0
        %1000 = vmatpush1.msra.mxu0 0.0
        %1001 = vmatprep.subr.mxu0 0.0
        %1002 = vmatpush1.msra.mxu0 0.0
        %1003 = vmatprep.subr.mxu0 0.0
        %1004 = vmatpush1.msra.mxu0 0.0
        %1005 = vmatprep.subr.mxu0 %v941
        %1006 = vmatpush1.msra.mxu0 %v940
        %1007 = vmatprep.subr.mxu0 %v935
        %1008 = vmatpush1.msra.mxu0 %v934
        %1009 = vmatprep.subr.mxu0 %v929
        %1010 = vmatpush1.msra.mxu0 %v928
        %1011 = vmatprep.subr.mxu0 %v923
        %1012 = vmatpush1.msra.mxu0 %v922
        %1013 = vmatprep.subr.mxu0 0.0
        %1014 = vmatpush2.msra.mxu0 0.0
        %1015 = vmatprep.subr.mxu0 0.0
        %1016 = vmatpush2.msra.mxu0 0.0
        %1017 = vmatprep.subr.mxu0 0.0
        %1018 = vmatpush2.msra.mxu0 0.0
        %1019 = vmatprep.subr.mxu0 0.0
        %1020 = vmatpush2.msra.mxu0 0.0
        %1021 = vmatprep.subr.mxu0 0.0
        %1022 = vmatpush2.msra.mxu0 0.0
        %1023 = vmatprep.subr.mxu0 0.0
        %1024 = vmatpush2.msra.mxu0 0.0
        %1025 = vmatprep.subr.mxu0 0.0
        %1026 = vmatpush2.msra.mxu0 0.0
        %1027 = vmatprep.subr.mxu0 0.0
        %1028 = vmatpush2.msra.mxu0 0.0
        %1029 = vmatprep.subr.mxu0 0.0
        %1030 = vmatpush2.msra.mxu0 0.0
        %1031 = vmatprep.subr.mxu0 0.0
        %1032 = vmatpush2.msra.mxu0 0.0
        %1033 = vmatprep.subr.mxu0 0.0
        %1034 = vmatpush2.msra.mxu0 0.0
        %1035 = vmatprep.subr.mxu0 0.0
        %1036 = vmatpush2.msra.mxu0 0.0
        %1037 = vmatprep.subr.mxu0 0.0
        %1038 = vmatpush2.msra.mxu0 0.0
        %1039 = vmatprep.subr.mxu0 0.0
        %1040 = vmatpush2.msra.mxu0 0.0
        %1041 = vmatprep.subr.mxu0 0.0
        %1042 = vmatpush2.msra.mxu0 0.0
        %1043 = vmatprep.subr.mxu0 0.0
        %1044 = vmatpush2.msra.mxu0 0.0
        %1045 = vmatprep.mubr.f32.mxu0 0.0
        %1046 = vmatmul.mubr.f32.gmra.mxu0 %v979
        %v1047 = vpop.f32.mrf.mxu0
        %v1048 = vadd.f32 %v951, %v1047
        %v1049 = vpop.f32.mrf.mxu0
        %v1050 = vadd.f32 %v955, %v1049
        %1051 = vdwg.mxu0
        %1052 = vmatprep.subr.mxu0 0.0
        %1053 = vmatpush1.msra.mxu0 0.0
        %1054 = vmatprep.subr.mxu0 0.0
        %1055 = vmatpush1.msra.mxu0 0.0
        %1056 = vmatprep.subr.mxu0 0.0
        %1057 = vmatpush1.msra.mxu0 0.0
        %1058 = vmatprep.subr.mxu0 0.0
        %1059 = vmatpush1.msra.mxu0 0.0
        %1060 = vmatprep.subr.mxu0 0.0
        %1061 = vmatpush1.msra.mxu0 0.0
        %1062 = vmatprep.subr.mxu0 0.0
        %1063 = vmatpush1.msra.mxu0 0.0
        %1064 = vmatprep.subr.mxu0 0.0
        %1065 = vmatpush1.msra.mxu0 0.0
        %1066 = vmatprep.subr.mxu0 0.0
        %1067 = vmatpush1.msra.mxu0 0.0
        %1068 = vmatprep.subr.mxu0 0.0
        %1069 = vmatpush1.msra.mxu0 0.0
        %1070 = vmatprep.subr.mxu0 0.0
        %1071 = vmatpush1.msra.mxu0 0.0
        %1072 = vmatprep.subr.mxu0 0.0
        %1073 = vmatpush1.msra.mxu0 0.0
        %1074 = vmatprep.subr.mxu0 0.0
        %1075 = vmatpush1.msra.mxu0 0.0
        %1076 = vmatprep.subr.mxu0 %v943
        %1077 = vmatpush1.msra.mxu0 %v942
        %1078 = vmatprep.subr.mxu0 %v937
        %1079 = vmatpush1.msra.mxu0 %v936
        %1080 = vmatprep.subr.mxu0 %v931
        %1081 = vmatpush1.msra.mxu0 %v930
        %1082 = vmatprep.subr.mxu0 %v925
        %1083 = vmatpush1.msra.mxu0 %v924
        %1084 = vmatprep.subr.mxu0 0.0
        %1085 = vmatpush2.msra.mxu0 0.0
        %1086 = vmatprep.subr.mxu0 0.0
        %1087 = vmatpush2.msra.mxu0 0.0
        %1088 = vmatprep.subr.mxu0 0.0
        %1089 = vmatpush2.msra.mxu0 0.0
        %1090 = vmatprep.subr.mxu0 0.0
        %1091 = vmatpush2.msra.mxu0 0.0
        %1092 = vmatprep.subr.mxu0 0.0
        %1093 = vmatpush2.msra.mxu0 0.0
        %1094 = vmatprep.subr.mxu0 0.0
        %1095 = vmatpush2.msra.mxu0 0.0
        %1096 = vmatprep.subr.mxu0 0.0
        %1097 = vmatpush2.msra.mxu0 0.0
        %1098 = vmatprep.subr.mxu0 0.0
        %1099 = vmatpush2.msra.mxu0 0.0
        %1100 = vmatprep.subr.mxu0 0.0
        %1101 = vmatpush2.msra.mxu0 0.0
        %1102 = vmatprep.subr.mxu0 0.0
        %1103 = vmatpush2.msra.mxu0 0.0
        %1104 = vmatprep.subr.mxu0 0.0
        %1105 = vmatpush2.msra.mxu0 0.0
        %1106 = vmatprep.subr.mxu0 0.0
        %1107 = vmatpush2.msra.mxu0 0.0
        %1108 = vmatprep.subr.mxu0 0.0
        %1109 = vmatpush2.msra.mxu0 0.0
        %1110 = vmatprep.subr.mxu0 0.0
        %1111 = vmatpush2.msra.mxu0 0.0
        %1112 = vmatprep.subr.mxu0 0.0
        %1113 = vmatpush2.msra.mxu0 0.0
        %1114 = vmatprep.subr.mxu0 0.0
        %1115 = vmatpush2.msra.mxu0 0.0
        %1116 = vmatprep.mubr.f32.mxu0 0.0
        %1117 = vmatmul.mubr.f32.gmra.mxu0 %v979
        %v1118 = vpop.f32.mrf.mxu0
        %v1119 = vadd.f32 %v959, %v1118
        %v1120 = vpop.f32.mrf.mxu0
        %v1121 = vadd.f32 %v963, %v1120
        %1122 = vdwg.mxu0
        %1123 = vmatprep.subr.mxu0 0.0
        %1124 = vmatpush1.msra.mxu0 0.0
        %1125 = vmatprep.subr.mxu0 0.0
        %1126 = vmatpush1.msra.mxu0 0.0
        %1127 = vmatprep.subr.mxu0 0.0
        %1128 = vmatpush1.msra.mxu0 0.0
        %1129 = vmatprep.subr.mxu0 0.0
        %1130 = vmatpush1.msra.mxu0 0.0
        %1131 = vmatprep.subr.mxu0 0.0
        %1132 = vmatpush1.msra.mxu0 0.0
        %1133 = vmatprep.subr.mxu0 0.0
        %1134 = vmatpush1.msra.mxu0 0.0
        %1135 = vmatprep.subr.mxu0 0.0
        %1136 = vmatpush1.msra.mxu0 0.0
        %1137 = vmatprep.subr.mxu0 0.0
        %1138 = vmatpush1.msra.mxu0 0.0
        %1139 = vmatprep.subr.mxu0 0.0
        %1140 = vmatpush1.msra.mxu0 0.0
        %1141 = vmatprep.subr.mxu0 0.0
        %1142 = vmatpush1.msra.mxu0 0.0
        %1143 = vmatprep.subr.mxu0 0.0
        %1144 = vmatpush1.msra.mxu0 0.0
        %1145 = vmatprep.subr.mxu0 0.0
        %1146 = vmatpush1.msra.mxu0 0.0
        %1147 = vmatprep.subr.mxu0 %v945
        %1148 = vmatpush1.msra.mxu0 %v944
        %1149 = vmatprep.subr.mxu0 %v939
        %1150 = vmatpush1.msra.mxu0 %v938
        %1151 = vmatprep.subr.mxu0 %v933
        %1152 = vmatpush1.msra.mxu0 %v932
        %1153 = vmatprep.subr.mxu0 %v927
        %1154 = vmatpush1.msra.mxu0 %v926
        %1155 = vmatprep.subr.mxu0 0.0
        %1156 = vmatpush2.msra.mxu0 0.0
        %1157 = vmatprep.subr.mxu0 0.0
        %1158 = vmatpush2.msra.mxu0 0.0
        %1159 = vmatprep.subr.mxu0 0.0
        %1160 = vmatpush2.msra.mxu0 0.0
        %1161 = vmatprep.subr.mxu0 0.0
        %1162 = vmatpush2.msra.mxu0 0.0
        %1163 = vmatprep.subr.mxu0 0.0
        %1164 = vmatpush2.msra.mxu0 0.0
        %1165 = vmatprep.subr.mxu0 0.0
        %1166 = vmatpush2.msra.mxu0 0.0
        %1167 = vmatprep.subr.mxu0 0.0
        %1168 = vmatpush2.msra.mxu0 0.0
        %1169 = vmatprep.subr.mxu0 0.0
        %1170 = vmatpush2.msra.mxu0 0.0
        %1171 = vmatprep.subr.mxu0 0.0
        %1172 = vmatpush2.msra.mxu0 0.0
        %1173 = vmatprep.subr.mxu0 0.0
        %1174 = vmatpush2.msra.mxu0 0.0
        %1175 = vmatprep.subr.mxu0 0.0
        %1176 = vmatpush2.msra.mxu0 0.0
        %1177 = vmatprep.subr.mxu0 0.0
        %1178 = vmatpush2.msra.mxu0 0.0
        %1179 = vmatprep.subr.mxu0 0.0
        %1180 = vmatpush2.msra.mxu0 0.0
        %1181 = vmatprep.subr.mxu0 0.0
        %1182 = vmatpush2.msra.mxu0 0.0
        %1183 = vmatprep.subr.mxu0 0.0
        %1184 = vmatpush2.msra.mxu0 0.0
        %1185 = vmatprep.subr.mxu0 0.0
        %1186 = vmatpush2.msra.mxu0 0.0
        %1187 = vmatprep.mubr.f32.mxu0 0.0
        %1188 = vmatmul.mubr.f32.gmra.mxu0 %v979
        %v1189 = vpop.f32.mrf.mxu0
        %v1190 = vadd.f32 %v967, %v1189
        %v1191 = vpop.f32.mrf.mxu0
        %v1192 = vadd.f32 %v971, %v1191
        %1193 = vdwg.mxu0
        %v1194 = vmul.f32 %v1190, %v1190
        %v1195 = vld [vmem:[#allocation9] sm:$0xff]
        %v1196 = vld [vmem:[#allocation9 + $0x8] sm:$0xff]
        %vm1197 = vcmask 130048
        %v1199 = vsel %vm1197, %v1194, 0
        %1201 = vmatprep.subr.mxu0 0.0
        %1202 = vmatpush1.msra.mxu0 0.0
        %1203 = vmatprep.subr.mxu0 0.0
        %1204 = vmatpush1.msra.mxu0 0.0
        %1205 = vmatprep.subr.mxu0 0.0
        %1206 = vmatpush1.msra.mxu0 0.0
        %1207 = vmatprep.subr.mxu0 0.0
        %1208 = vmatpush1.msra.mxu0 0.0
        %1209 = vmatprep.subr.mxu0 0.0
        %1210 = vmatpush1.msra.mxu0 0.0
        %1211 = vmatprep.subr.mxu0 0.0
        %1212 = vmatpush1.msra.mxu0 0.0
        %1213 = vmatprep.subr.mxu0 0.0
        %1214 = vmatpush1.msra.mxu0 0.0
        %1215 = vmatprep.subr.mxu0 0.0
        %1216 = vmatpush1.msra.mxu0 0.0
        %1217 = vmatprep.subr.mxu0 0.0
        %1218 = vmatpush1.msra.mxu0 0.0
        %1219 = vmatprep.subr.mxu0 0.0
        %1220 = vmatpush1.msra.mxu0 0.0
        %1221 = vmatprep.subr.mxu0 0.0
        %1222 = vmatpush1.msra.mxu0 0.0
        %1223 = vmatprep.subr.mxu0 0.0
        %1224 = vmatpush1.msra.mxu0 0.0
        %1225 = vmatprep.subr.mxu0 0.0
        %1226 = vmatpush1.msra.mxu0 0.0
        %1227 = vmatprep.subr.mxu0 0.0
        %1228 = vmatpush1.msra.mxu0 0.0
        %1229 = vmatprep.subr.mxu0 0.0
        %1230 = vmatpush1.msra.mxu0 %v1196
        %1231 = vmatprep.subr.mxu0 0.0
        %1232 = vmatpush1.msra.mxu0 %v1195
        %1233 = vmatprep.subr.mxu0 0.0
        %1234 = vmatpush2.msra.mxu0 0.0
        %1235 = vmatprep.subr.mxu0 0.0
        %1236 = vmatpush2.msra.mxu0 0.0
        %1237 = vmatprep.subr.mxu0 0.0
        %1238 = vmatpush2.msra.mxu0 0.0
        %1239 = vmatprep.subr.mxu0 0.0
        %1240 = vmatpush2.msra.mxu0 0.0
        %1241 = vmatprep.subr.mxu0 0.0
        %1242 = vmatpush2.msra.mxu0 0.0
        %1243 = vmatprep.subr.mxu0 0.0
        %1244 = vmatpush2.msra.mxu0 0.0
        %1245 = vmatprep.subr.mxu0 0.0
        %1246 = vmatpush2.msra.mxu0 0.0
        %1247 = vmatprep.subr.mxu0 0.0
        %1248 = vmatpush2.msra.mxu0 0.0
        %1249 = vmatprep.subr.mxu0 0.0
        %1250 = vmatpush2.msra.mxu0 0.0
        %1251 = vmatprep.subr.mxu0 0.0
        %1252 = vmatpush2.msra.mxu0 0.0
        %1253 = vmatprep.subr.mxu0 0.0
        %1254 = vmatpush2.msra.mxu0 0.0
        %1255 = vmatprep.subr.mxu0 0.0
        %1256 = vmatpush2.msra.mxu0 0.0
        %1257 = vmatprep.subr.mxu0 0.0
        %1258 = vmatpush2.msra.mxu0 0.0
        %1259 = vmatprep.subr.mxu0 0.0
        %1260 = vmatpush2.msra.mxu0 0.0
        %1261 = vmatprep.subr.mxu0 0.0
        %1262 = vmatpush2.msra.mxu0 0.0
        %1263 = vmatprep.subr.mxu0 0.0
        %1264 = vmatpush2.msra.mxu0 0.0
        %1265 = vmatprep.mubr.f32.mxu0 0.0
        %1266 = vmatmul.mubr.f32.gmra.mxu0 %v1199
        %v1267 = vpop.f32.mrf.mxu0
        %v1268 = vadd.f32 1e-08, %v1267
        %v1269 = vpop.f32.mrf.mxu0
        %1270 = vdwg.mxu0
        %v1271 = vrsqrt.pop %v1268
        %v1272 = vmul.f32 %v1192, %v1192
        %v1273 = vld [vmem:[#allocation10] sm:$0xff]
        %v1274 = vld [vmem:[#allocation10 + $0x8] sm:$0xff]
        %v1276 = vsel %vm1197, %v1272, 0
        %1278 = vmatprep.subr.mxu0 0.0
        %1279 = vmatpush1.msra.mxu0 0.0
        %1280 = vmatprep.subr.mxu0 0.0
        %1281 = vmatpush1.msra.mxu0 0.0
        %1282 = vmatprep.subr.mxu0 0.0
        %1283 = vmatpush1.msra.mxu0 0.0
        %1284 = vmatprep.subr.mxu0 0.0
        %1285 = vmatpush1.msra.mxu0 0.0
        %1286 = vmatprep.subr.mxu0 0.0
        %1287 = vmatpush1.msra.mxu0 0.0
        %1288 = vmatprep.subr.mxu0 0.0
        %1289 = vmatpush1.msra.mxu0 0.0
        %1290 = vmatprep.subr.mxu0 0.0
        %1291 = vmatpush1.msra.mxu0 0.0
        %1292 = vmatprep.subr.mxu0 0.0
        %1293 = vmatpush1.msra.mxu0 0.0
        %1294 = vmatprep.subr.mxu0 0.0
        %1295 = vmatpush1.msra.mxu0 0.0
        %1296 = vmatprep.subr.mxu0 0.0
        %1297 = vmatpush1.msra.mxu0 0.0
        %1298 = vmatprep.subr.mxu0 0.0
        %1299 = vmatpush1.msra.mxu0 0.0
        %1300 = vmatprep.subr.mxu0 0.0
        %1301 = vmatpush1.msra.mxu0 0.0
        %1302 = vmatprep.subr.mxu0 0.0
        %1303 = vmatpush1.msra.mxu0 0.0
        %1304 = vmatprep.subr.mxu0 0.0
        %1305 = vmatpush1.msra.mxu0 0.0
        %1306 = vmatprep.subr.mxu0 0.0
        %1307 = vmatpush1.msra.mxu0 %v1274
        %1308 = vmatprep.subr.mxu0 0.0
        %1309 = vmatpush1.msra.mxu0 %v1273
        %1310 = vmatprep.subr.mxu0 0.0
        %1311 = vmatpush2.msra.mxu0 0.0
        %1312 = vmatprep.subr.mxu0 0.0
        %1313 = vmatpush2.msra.mxu0 0.0
        %1314 = vmatprep.subr.mxu0 0.0
        %1315 = vmatpush2.msra.mxu0 0.0
        %1316 = vmatprep.subr.mxu0 0.0
        %1317 = vmatpush2.msra.mxu0 0.0
        %1318 = vmatprep.subr.mxu0 0.0
        %1319 = vmatpush2.msra.mxu0 0.0
        %1320 = vmatprep.subr.mxu0 0.0
        %1321 = vmatpush2.msra.mxu0 0.0
        %1322 = vmatprep.subr.mxu0 0.0
        %1323 = vmatpush2.msra.mxu0 0.0
        %1324 = vmatprep.subr.mxu0 0.0
        %1325 = vmatpush2.msra.mxu0 0.0
        %1326 = vmatprep.subr.mxu0 0.0
        %1327 = vmatpush2.msra.mxu0 0.0
        %1328 = vmatprep.subr.mxu0 0.0
        %1329 = vmatpush2.msra.mxu0 0.0
        %1330 = vmatprep.subr.mxu0 0.0
        %1331 = vmatpush2.msra.mxu0 0.0
        %1332 = vmatprep.subr.mxu0 0.0
        %1333 = vmatpush2.msra.mxu0 0.0
        %1334 = vmatprep.subr.mxu0 0.0
        %1335 = vmatpush2.msra.mxu0 0.0
        %1336 = vmatprep.subr.mxu0 0.0
        %1337 = vmatpush2.msra.mxu0 0.0
        %1338 = vmatprep.subr.mxu0 0.0
        %1339 = vmatpush2.msra.mxu0 0.0
        %1340 = vmatprep.subr.mxu0 0.0
        %1341 = vmatpush2.msra.mxu0 0.0
        %1342 = vmatprep.mubr.f32.mxu0 0.0
        %1343 = vmatmul.mubr.f32.gmra.mxu0 %v1276
        %v1344 = vpop.f32.mrf.mxu0
        %v1345 = vadd.f32 1e-08, %v1344
        %v1346 = vpop.f32.mrf.mxu0
        %1347 = vdwg.mxu0
        %v1348 = vrsqrt.pop %v1345
        %v1349 = vld [vmem:[%s16] sm:$0xff]
        %v1350 = vld [vmem:[%s16 + $0x8] sm:$0x3]
        %v1351 = vld [vmem:[%s17] sm:$0xff]
        %v1352 = vld [vmem:[%s17 + $0x8] sm:$0xff]
        %v1353 = vld [vmem:[%s17 + $0x10] sm:$0x3]
        %vm1354 = vcmask 15360
        %v1356 = vsel %vm1354, %v1349, 0
        %v1359 = vsel %vm1354, %v1350, 0
        %vm1361 = vcmask 1041408
        %v1363 = vsel %vm1361, %v1048, 0
        %v1366 = vsel %vm1361, %v1050, 0
        %1368 = vmatprep.subr.mxu0 0.0
        %1369 = vmatpush1.msra.mxu0 0.0
        %1370 = vmatprep.subr.mxu0 0.0
        %1371 = vmatpush1.msra.mxu0 0.0
        %1372 = vmatprep.subr.mxu0 0.0
        %1373 = vmatpush1.msra.mxu0 0.0
        %1374 = vmatprep.subr.mxu0 0.0
        %1375 = vmatpush1.msra.mxu0 0.0
        %1376 = vmatprep.subr.mxu0 0.0
        %1377 = vmatpush1.msra.mxu0 0.0
        %1378 = vmatprep.subr.mxu0 0.0
        %1379 = vmatpush1.msra.mxu0 0.0
        %1380 = vmatprep.subr.mxu0 0.0
        %1381 = vmatpush1.msra.mxu0 0.0
        %1382 = vmatprep.subr.mxu0 0.0
        %1383 = vmatpush1.msra.mxu0 0.0
        %1384 = vmatprep.subr.mxu0 0.0
        %1385 = vmatpush1.msra.mxu0 0.0
        %1386 = vmatprep.subr.mxu0 0.0
        %1387 = vmatpush1.msra.mxu0 0.0
        %1388 = vmatprep.subr.mxu0 0.0
        %1389 = vmatpush1.msra.mxu0 0.0
        %1390 = vmatprep.subr.mxu0 0.0
        %1391 = vmatpush1.msra.mxu0 0.0
        %1392 = vmatprep.subr.mxu0 0.0
        %1393 = vmatpush1.msra.mxu0 0.0
        %1394 = vmatprep.subr.mxu0 0.0
        %1395 = vmatpush1.msra.mxu0 0.0
        %1396 = vmatprep.subr.mxu0 0.0
        %1397 = vmatpush1.msra.mxu0 0.0
        %1398 = vmatprep.subr.mxu0 %v1366
        %1399 = vmatpush1.msra.mxu0 %v1363
        %1400 = vmatprep.subr.mxu0 0.0
        %1401 = vmatpush2.msra.mxu0 0.0
        %1402 = vmatprep.subr.mxu0 0.0
        %1403 = vmatpush2.msra.mxu0 0.0
        %1404 = vmatprep.subr.mxu0 0.0
        %1405 = vmatpush2.msra.mxu0 0.0
        %1406 = vmatprep.subr.mxu0 0.0
        %1407 = vmatpush2.msra.mxu0 0.0
        %1408 = vmatprep.subr.mxu0 0.0
        %1409 = vmatpush2.msra.mxu0 0.0
        %1410 = vmatprep.subr.mxu0 0.0
        %1411 = vmatpush2.msra.mxu0 0.0
        %1412 = vmatprep.subr.mxu0 0.0
        %1413 = vmatpush2.msra.mxu0 0.0
        %1414 = vmatprep.subr.mxu0 0.0
        %1415 = vmatpush2.msra.mxu0 0.0
        %1416 = vmatprep.subr.mxu0 0.0
        %1417 = vmatpush2.msra.mxu0 0.0
        %1418 = vmatprep.subr.mxu0 0.0
        %1419 = vmatpush2.msra.mxu0 0.0
        %1420 = vmatprep.subr.mxu0 0.0
        %1421 = vmatpush2.msra.mxu0 0.0
        %1422 = vmatprep.subr.mxu0 0.0
        %1423 = vmatpush2.msra.mxu0 0.0
        %1424 = vmatprep.subr.mxu0 0.0
        %1425 = vmatpush2.msra.mxu0 0.0
        %1426 = vmatprep.subr.mxu0 0.0
        %1427 = vmatpush2.msra.mxu0 0.0
        %1428 = vmatprep.subr.mxu0 0.0
        %1429 = vmatpush2.msra.mxu0 0.0
        %1430 = vmatprep.subr.mxu0 0.0
        %1431 = vmatpush2.msra.mxu0 0.0
        %1432 = vmatprep.mubr.f32.mxu0 0.0
        %1433 = vmatmul.mubr.f32.gmra.mxu0 %v1356
        %v1434 = vpop.f32.mrf.mxu0
        %v1435 = vadd.f32 0.0, %v1434
        %v1436 = vpop.f32.mrf.mxu0
        %v1437 = vadd.f32 0.0, %v1436
        %1438 = vmatprep.mubr.f32.mxu0 0.0
        %1439 = vmatmul.mubr.f32.gmra.mxu0 %v1359
        %v1440 = vpop.f32.mrf.mxu0
        %v1441 = vadd.f32 0.0, %v1440
        %v1442 = vpop.f32.mrf.mxu0
        %v1443 = vadd.f32 0.0, %v1442
        %1444 = vdwg.mxu0
        %v1445 = vld [vmem:[%s11] sm:$0xff]
        %v1446 = vld [vmem:[%s11 + $0x8] sm:$0xff]
        %v1447 = vld [vmem:[%s11 + $0x10] sm:$0x3]
        %v1448 = vld [vmem:[%s11 + $0x18] sm:$0x3]
        %v1449 = vmul.f32 %v1445, %v1435
        %v1450 = vmul.f32 %v1446, %v1437
        %v1451 = vmul.f32 %v1447, %v1441
        %v1452 = vmul.f32 %v1448, %v1443
        %v1453 = vpack.c.bf16 %v1451, %v1449
        %v1454 = vpack.c.bf16 %v1452, %v1450
        %v1455 = vld [vmem:[#allocation12] sm:$0xf]
        %v1456 = vld [vmem:[#allocation12 + $0x4] sm:$0xf]
        %v1457 = vld [vmem:[#allocation12 + $0x8] sm:$0xf]
        %v1458 = vld [vmem:[#allocation12 + $0xc] sm:$0xf]
        %v1459 = vld [vmem:[#allocation12 + $0x10] sm:$0xf]
        %v1460 = vld [vmem:[#allocation12 + $0x14] sm:$0xf]
        %v1461 = vld [vmem:[#allocation12 + $0x18] sm:$0xf]
        %v1462 = vld [vmem:[#allocation12 + $0x1c] sm:$0xf]
        %v1463 = vld [vmem:[#allocation12 + $0x20] sm:$0xf]
        %v1464 = vld [vmem:[#allocation12 + $0x24] sm:$0xf]
        %v1465 = vld [vmem:[#allocation12 + $0x28] sm:$0xf]
        %v1466 = vld [vmem:[#allocation12 + $0x2c] sm:$0xf]
        %v1467 = vld [vmem:[#allocation12 + $0x30] sm:$0xf]
        %v1468 = vld [vmem:[#allocation12 + $0x34] sm:$0xf]
        %v1469 = vld [vmem:[#allocation12 + $0x38] sm:$0xf]
        %v1470 = vld [vmem:[#allocation12 + $0x3c] sm:$0xf]
        %v1471 = vld [vmem:[#allocation12 + $0x40] sm:$0xf]
        %v1472 = vld [vmem:[#allocation12 + $0x44] sm:$0xf]
        %v1473 = vld [vmem:[#allocation12 + $0x48] sm:$0xf]
        %v1474 = vld [vmem:[#allocation12 + $0x4c] sm:$0xf]
        %v1475 = vld [vmem:[#allocation12 + $0x50] sm:$0xf]
        %v1476 = vld [vmem:[#allocation12 + $0x54] sm:$0xf]
        %v1477 = vld [vmem:[#allocation12 + $0x58] sm:$0xf]
        %v1478 = vld [vmem:[#allocation12 + $0x5c] sm:$0xf]
        %v1503 = vunpack.c.l.b16 %v1455
        %v1504 = vunpack.c.l.b16 %v1456
        %v1505 = vunpack.c.l.b16 %v1457
        %v1506 = vunpack.c.l.b16 %v1458
        %v1507 = vunpack.c.l.b16 %v1459
        %v1508 = vunpack.c.l.b16 %v1460
        %v1509 = vunpack.c.l.b16 %v1461
        %v1510 = vunpack.c.l.b16 %v1462
        %v1511 = vunpack.c.l.b16 %v1463
        %v1512 = vunpack.c.l.b16 %v1464
        %v1513 = vunpack.c.l.b16 %v1465
        %v1514 = vunpack.c.l.b16 %v1466
        %v1515 = vunpack.c.l.b16 %v1467
        %v1516 = vunpack.c.l.b16 %v1468
        %v1517 = vunpack.c.l.b16 %v1469
        %v1518 = vunpack.c.l.b16 %v1470
        %v1519 = vunpack.c.l.b16 %v1471
        %v1520 = vunpack.c.l.b16 %v1472
        %v1521 = vunpack.c.l.b16 %v1473
        %v1522 = vunpack.c.l.b16 %v1474
        %v1523 = vunpack.c.l.b16 %v1475
        %v1524 = vunpack.c.l.b16 %v1476
        %v1525 = vunpack.c.l.b16 %v1477
        %v1526 = vunpack.c.l.b16 %v1478
        %v1527 = vpack.c.b16 %v1504, %v1503
        %v1528 = vpack.c.b16 %v1506, %v1505
        %v1529 = vpack.c.b16 %v1508, %v1507
        %v1530 = vpack.c.b16 %v1510, %v1509
        %v1531 = vpack.c.b16 %v1512, %v1511
        %v1532 = vpack.c.b16 %v1514, %v1513
        %v1533 = vpack.c.b16 %v1516, %v1515
        %v1534 = vpack.c.b16 %v1518, %v1517
        %v1535 = vpack.c.b16 %v1520, %v1519
        %v1536 = vpack.c.b16 %v1522, %v1521
        %v1537 = vpack.c.b16 %v1524, %v1523
        %v1538 = vpack.c.b16 %v1526, %v1525
        %vm1551 = vcmask 523264
        %v1553 = vsel %vm1551, %v1454, 0
        %1555 = vmatprep.subr.bf16.mxu0 0
        %1556 = vmatpush1.bf16.msra.mxu0 %v1534
        %1557 = vmatprep.subr.bf16.mxu0 0
        %1558 = vmatpush1.bf16.msra.mxu0 %v1533
        %1559 = vmatprep.subr.bf16.mxu0 0
        %1560 = vmatpush1.bf16.msra.mxu0 %v1532
        %1561 = vmatprep.subr.bf16.mxu0 0
        %1562 = vmatpush1.bf16.msra.mxu0 %v1531
        %1563 = vmatprep.subr.bf16.mxu0 0
        %1564 = vmatpush1.bf16.msra.mxu0 %v1530
        %1565 = vmatprep.subr.bf16.mxu0 0
        %1566 = vmatpush1.bf16.msra.mxu0 %v1529
        %1567 = vmatprep.subr.bf16.mxu0 0
        %1568 = vmatpush1.bf16.msra.mxu0 %v1528
        %1569 = vmatprep.subr.bf16.mxu0 0
        %1570 = vmatpush1.bf16.msra.mxu0 %v1527
        %1571 = vmatprep.subr.bf16.mxu0 0
        %1572 = vmatpush2.bf16.msra.mxu0 0
        %1573 = vmatprep.subr.bf16.mxu0 0
        %1574 = vmatpush2.bf16.msra.mxu0 0
        %1575 = vmatprep.subr.bf16.mxu0 0
        %1576 = vmatpush2.bf16.msra.mxu0 0
        %1577 = vmatprep.subr.bf16.mxu0 0
        %1578 = vmatpush2.bf16.msra.mxu0 0
        %1579 = vmatprep.subr.bf16.mxu0 0
        %1580 = vmatpush2.bf16.msra.mxu0 %v1538
        %1581 = vmatprep.subr.bf16.mxu0 0
        %1582 = vmatpush2.bf16.msra.mxu0 %v1537
        %1583 = vmatprep.subr.bf16.mxu0 0
        %1584 = vmatpush2.bf16.msra.mxu0 %v1536
        %1585 = vmatprep.subr.bf16.mxu0 0
        %1586 = vmatpush2.bf16.msra.mxu0 %v1535
        %1587 = vmatprep.mubr.bf16.mxu0 %v1553
        %1588 = vmatmul.mubr.bf16.gmra.mxu0 %v1453
        %v1589 = vpop.f32.mrf.mxu0
        %v1590 = vadd.f32 0.0, %v1589
        %v1591 = vpop.f32.mrf.mxu0
        %v1592 = vpop.f32.mrf.mxu0
        %v1593 = vadd.f32 0.0, %v1592
        %v1594 = vpop.f32.mrf.mxu0
        %1595 = vdwg.mxu0
        %v1597 = vsel %vm1361, %v1271, 0
        %1599 = vmatprep.subr.mxu0 0.0
        %1600 = vmatpush1.msra.mxu0 0.0
        %1601 = vmatprep.subr.mxu0 0.0
        %1602 = vmatpush1.msra.mxu0 0.0
        %1603 = vmatprep.subr.mxu0 0.0
        %1604 = vmatpush1.msra.mxu0 0.0
        %1605 = vmatprep.subr.mxu0 0.0
        %1606 = vmatpush1.msra.mxu0 0.0
        %1607 = vmatprep.subr.mxu0 0.0
        %1608 = vmatpush1.msra.mxu0 0.0
        %1609 = vmatprep.subr.mxu0 0.0
        %1610 = vmatpush1.msra.mxu0 0.0
        %1611 = vmatprep.subr.mxu0 0.0
        %1612 = vmatpush1.msra.mxu0 0.0
        %1613 = vmatprep.subr.mxu0 0.0
        %1614 = vmatpush1.msra.mxu0 0.0
        %1615 = vmatprep.subr.mxu0 0.0
        %1616 = vmatpush1.msra.mxu0 0.0
        %1617 = vmatprep.subr.mxu0 0.0
        %1618 = vmatpush1.msra.mxu0 0.0
        %1619 = vmatprep.subr.mxu0 0.0
        %1620 = vmatpush1.msra.mxu0 0.0
        %1621 = vmatprep.subr.mxu0 0.0
        %1622 = vmatpush1.msra.mxu0 0.0
        %1623 = vmatprep.subr.mxu0 0.0
        %1624 = vmatpush1.msra.mxu0 0.0
        %1625 = vmatprep.subr.mxu0 0.0
        %1626 = vmatpush1.msra.mxu0 0.0
        %1627 = vmatprep.subr.mxu0 0.0
        %1628 = vmatpush1.msra.mxu0 0.0
        %1629 = vmatprep.subr.mxu0 0.0
        %1630 = vmatpush1.msra.mxu0 %v1597
        %1631 = vmatprep.subr.mxu0 0.0
        %1632 = vmatpush2.msra.mxu0 0.0
        %1633 = vmatprep.subr.mxu0 0.0
        %1634 = vmatpush2.msra.mxu0 0.0
        %1635 = vmatprep.subr.mxu0 0.0
        %1636 = vmatpush2.msra.mxu0 0.0
        %1637 = vmatprep.subr.mxu0 0.0
        %1638 = vmatpush2.msra.mxu0 0.0
        %1639 = vmatprep.subr.mxu0 0.0
        %1640 = vmatpush2.msra.mxu0 0.0
        %1641 = vmatprep.subr.mxu0 0.0
        %1642 = vmatpush2.msra.mxu0 0.0
        %1643 = vmatprep.subr.mxu0 0.0
        %1644 = vmatpush2.msra.mxu0 0.0
        %1645 = vmatprep.subr.mxu0 0.0
        %1646 = vmatpush2.msra.mxu0 0.0
        %1647 = vmatprep.subr.mxu0 0.0
        %1648 = vmatpush2.msra.mxu0 0.0
        %1649 = vmatprep.subr.mxu0 0.0
        %1650 = vmatpush2.msra.mxu0 0.0
        %1651 = vmatprep.subr.mxu0 0.0
        %1652 = vmatpush2.msra.mxu0 0.0
        %1653 = vmatprep.subr.mxu0 0.0
        %1654 = vmatpush2.msra.mxu0 0.0
        %1655 = vmatprep.subr.mxu0 0.0
        %1656 = vmatpush2.msra.mxu0 0.0
        %1657 = vmatprep.subr.mxu0 0.0
        %1658 = vmatpush2.msra.mxu0 0.0
        %1659 = vmatprep.subr.mxu0 0.0
        %1660 = vmatpush2.msra.mxu0 0.0
        %1661 = vmatprep.subr.mxu0 0.0
        %1662 = vmatpush2.msra.mxu0 0.0
        %1663 = vmatprep.mubr.f32.mxu0 0.0
        %1664 = vmatmul.mubr.f32.gmra.mxu0 %v1356
        %v1665 = vpop.f32.mrf.mxu0
        %v1666 = vadd.f32 0.0, %v1665
        %v1667 = vpop.f32.mrf.mxu0
        %1668 = vmatprep.mubr.f32.mxu0 0.0
        %1669 = vmatmul.mubr.f32.gmra.mxu0 %v1359
        %v1670 = vpop.f32.mrf.mxu0
        %v1671 = vadd.f32 0.0, %v1670
        %v1672 = vpop.f32.mrf.mxu0
        %1673 = vdwg.mxu0
        %v1674 = vmul.f32 %v1590, %v1666
        %v1675 = vmul.f32 %v1593, %v1671
        %v1676 = vld [vmem:[%s9] sm:$0x1]
        %v1678 = vlaneseq
        %v1679 = vshrl.u32 %v1678, 7
        %v1680 = vsub.s32 0, %v1679
        %v1681 = vrot.slane %v1676, %v1680
        %v1683 = vadd.f32 %v1674, %v1681
        %v1684 = vadd.f32 %v1675, %v1681
        %vm1685 = vcmp.ge.f32.partialorder %v1683, 0.0
        %vm1686 = vcmp.ge.f32.partialorder %v1684, 0.0
        %v1687 = vmul.f32 %v1683, 0.2
        %v1688 = vmul.f32 %v1684, 0.2
        %v1689 = vsel %vm1685, %v1683, %v1687
        %v1690 = vsel %vm1686, %v1684, %v1688
        %v1691 = vmul.f32 %v1689, 1.4142135
        %v1692 = vmul.f32 %v1690, 1.4142135
        %v1694 = vsel %vm1361, %v1119, 0
        %1696 = vmatprep.subr.mxu0 0.0
        %1697 = vmatpush1.msra.mxu0 0.0
        %1698 = vmatprep.subr.mxu0 0.0
        %1699 = vmatpush1.msra.mxu0 0.0
        %1700 = vmatprep.subr.mxu0 0.0
        %1701 = vmatpush1.msra.mxu0 0.0
        %1702 = vmatprep.subr.mxu0 0.0
        %1703 = vmatpush1.msra.mxu0 0.0
        %1704 = vmatprep.subr.mxu0 0.0
        %1705 = vmatpush1.msra.mxu0 0.0
        %1706 = vmatprep.subr.mxu0 0.0
        %1707 = vmatpush1.msra.mxu0 0.0
        %1708 = vmatprep.subr.mxu0 0.0
        %1709 = vmatpush1.msra.mxu0 0.0
        %1710 = vmatprep.subr.mxu0 0.0
        %1711 = vmatpush1.msra.mxu0 0.0
        %1712 = vmatprep.subr.mxu0 0.0
        %1713 = vmatpush1.msra.mxu0 0.0
        %1714 = vmatprep.subr.mxu0 0.0
        %1715 = vmatpush1.msra.mxu0 0.0
        %1716 = vmatprep.subr.mxu0 0.0
        %1717 = vmatpush1.msra.mxu0 0.0
        %1718 = vmatprep.subr.mxu0 0.0
        %1719 = vmatpush1.msra.mxu0 0.0
        %1720 = vmatprep.subr.mxu0 0.0
        %1721 = vmatpush1.msra.mxu0 0.0
        %1722 = vmatprep.subr.mxu0 0.0
        %1723 = vmatpush1.msra.mxu0 0.0
        %1724 = vmatprep.subr.mxu0 0.0
        %1725 = vmatpush1.msra.mxu0 0.0
        %1726 = vmatprep.subr.mxu0 0.0
        %1727 = vmatpush1.msra.mxu0 %v1694
        %1728 = vmatprep.subr.mxu0 0.0
        %1729 = vmatpush2.msra.mxu0 0.0
        %1730 = vmatprep.subr.mxu0 0.0
        %1731 = vmatpush2.msra.mxu0 0.0
        %1732 = vmatprep.subr.mxu0 0.0
        %1733 = vmatpush2.msra.mxu0 0.0
        %1734 = vmatprep.subr.mxu0 0.0
        %1735 = vmatpush2.msra.mxu0 0.0
        %1736 = vmatprep.subr.mxu0 0.0
        %1737 = vmatpush2.msra.mxu0 0.0
        %1738 = vmatprep.subr.mxu0 0.0
        %1739 = vmatpush2.msra.mxu0 0.0
        %1740 = vmatprep.subr.mxu0 0.0
        %1741 = vmatpush2.msra.mxu0 0.0
        %1742 = vmatprep.subr.mxu0 0.0
        %1743 = vmatpush2.msra.mxu0 0.0
        %1744 = vmatprep.subr.mxu0 0.0
        %1745 = vmatpush2.msra.mxu0 0.0
        %1746 = vmatprep.subr.mxu0 0.0
        %1747 = vmatpush2.msra.mxu0 0.0
        %1748 = vmatprep.subr.mxu0 0.0
        %1749 = vmatpush2.msra.mxu0 0.0
        %1750 = vmatprep.subr.mxu0 0.0
        %1751 = vmatpush2.msra.mxu0 0.0
        %1752 = vmatprep.subr.mxu0 0.0
        %1753 = vmatpush2.msra.mxu0 0.0
        %1754 = vmatprep.subr.mxu0 0.0
        %1755 = vmatpush2.msra.mxu0 0.0
        %1756 = vmatprep.subr.mxu0 0.0
        %1757 = vmatpush2.msra.mxu0 0.0
        %1758 = vmatprep.subr.mxu0 0.0
        %1759 = vmatpush2.msra.mxu0 0.0
        %1760 = vmatprep.mubr.f32.mxu0 0.0
        %1761 = vmatmul.mubr.f32.gmra.mxu0 %v1356
        %v1762 = vpop.f32.mrf.mxu0
        %v1763 = vadd.f32 0.0, %v1762
        %v1764 = vpop.f32.mrf.mxu0
        %1765 = vmatprep.mubr.f32.mxu0 0.0
        %1766 = vmatmul.mubr.f32.gmra.mxu0 %v1359
        %v1767 = vpop.f32.mrf.mxu0
        %v1768 = vadd.f32 0.0, %v1767
        %v1769 = vpop.f32.mrf.mxu0
        %1770 = vdwg.mxu0
        %v1771 = vmul.f32 %v1691, %v1763
        %v1772 = vmul.f32 %v1692, %v1768
        %v1773 = vpack.c.bf16 %v1772, %v1771
        %v1774 = vld [vmem:[%s18] sm:$0xf]
        %v1775 = vld [vmem:[%s18 + $0x4] sm:$0xf]
        %v1776 = vld [vmem:[%s18 + $0x8] sm:$0x3]
        %v1780 = vunpack.c.l.b16 %v1774
        %v1781 = vunpack.c.l.b16 %v1775
        %v1782 = vunpack.c.l.b16 %v1776
        %v1783 = vpack.c.b16 %v1781, %v1780
        %v1784 = vpack.c.b16 %v1782, %v1782
        %vm1785 = vcmask 80896
        %v1787 = vsel %vm1785, %v1783, 0
        %v1790 = vsel %vm1785, %v1784, 0
        %vm1792 = vcmask 1044480
        %v1794 = vsel %vm1792, %v1773, 0
        %1796 = vmatprep.subr.bf16.mxu0 0
        %1797 = vmatpush1.bf16.msra.mxu0 0
        %1798 = vmatprep.subr.bf16.mxu0 0
        %1799 = vmatpush1.bf16.msra.mxu0 0
        %1800 = vmatprep.subr.bf16.mxu0 0
        %1801 = vmatpush1.bf16.msra.mxu0 0
        %1802 = vmatprep.subr.bf16.mxu0 0
        %1803 = vmatpush1.bf16.msra.mxu0 0
        %1804 = vmatprep.subr.bf16.mxu0 0
        %1805 = vmatpush1.bf16.msra.mxu0 0
        %1806 = vmatprep.subr.bf16.mxu0 0
        %1807 = vmatpush1.bf16.msra.mxu0 0
        %1808 = vmatprep.subr.bf16.mxu0 0
        %1809 = vmatpush1.bf16.msra.mxu0 0
        %1810 = vmatprep.subr.bf16.mxu0 0
        %1811 = vmatpush1.bf16.msra.mxu0 %v1794
        %1812 = vmatprep.subr.bf16.mxu0 0
        %1813 = vmatpush2.bf16.msra.mxu0 0
        %1814 = vmatprep.subr.bf16.mxu0 0
        %1815 = vmatpush2.bf16.msra.mxu0 0
        %1816 = vmatprep.subr.bf16.mxu0 0
        %1817 = vmatpush2.bf16.msra.mxu0 0
        %1818 = vmatprep.subr.bf16.mxu0 0
        %1819 = vmatpush2.bf16.msra.mxu0 0
        %1820 = vmatprep.subr.bf16.mxu0 0
        %1821 = vmatpush2.bf16.msra.mxu0 0
        %1822 = vmatprep.subr.bf16.mxu0 0
        %1823 = vmatpush2.bf16.msra.mxu0 0
        %1824 = vmatprep.subr.bf16.mxu0 0
        %1825 = vmatpush2.bf16.msra.mxu0 0
        %1826 = vmatprep.subr.bf16.mxu0 0
        %1827 = vmatpush2.bf16.msra.mxu0 0
        %1828 = vmatprep.mubr.bf16.mxu0 0
        %1829 = vmatmul.mubr.bf16.gmra.mxu0 %v1787
        %v1830 = vpop.f32.mrf.mxu0
        %v1831 = vadd.f32 0.0, %v1830
        %v1832 = vpop.f32.mrf.mxu0
        %v1833 = vpop.f32.mrf.mxu0
        %v1834 = vadd.f32 0.0, %v1833
        %v1835 = vpop.f32.mrf.mxu0
        %1836 = vmatprep.mubr.bf16.mxu0 0
        %1837 = vmatmul.mubr.bf16.gmra.mxu0 %v1790
        %v1838 = vpop.f32.mrf.mxu0
        %v1839 = vadd.f32 0.0, %v1838
        %v1840 = vpop.f32.mrf.mxu0
        %v1841 = vpop.f32.mrf.mxu0
        %v1842 = vpop.f32.mrf.mxu0
        %1843 = vdwg.mxu0
        %v1844 = vpack.c.bf16 %v1834, %v1831
        %v1845 = vpack.c.bf16 %v1839, %v1839
        %v1846 = vld [vmem:[%s13] sm:$0xf]
        %v1847 = vld [vmem:[%s13 + $0x4] sm:$0xf]
        %v1848 = vld [vmem:[%s13 + $0x8] sm:$0xf]
        %v1849 = vld [vmem:[%s13 + $0xc] sm:$0xf]
        %v1850 = vld [vmem:[%s13 + $0x10] sm:$0xf]
        %v1851 = vld [vmem:[%s13 + $0x14] sm:$0xf]
        %v1852 = vld [vmem:[%s13 + $0x18] sm:$0xf]
        %v1853 = vld [vmem:[%s13 + $0x1c] sm:$0xf]
        %s1854 = scalar_lea.vmem %s13, 32
        %v1855 = vld [vmem:[%s1854] sm:$0xf]
        %v1856 = vld [vmem:[%s1854 + $0x4] sm:$0xf]
        %v1857 = vld [vmem:[%s1854 + $0x8] sm:$0xf]
        %v1858 = vld [vmem:[%s1854 + $0xc] sm:$0xf]
        %v1859 = vld [vmem:[%s1854 + $0x10] sm:$0xf]
        %v1860 = vld [vmem:[%s1854 + $0x14] sm:$0xf]
        %v1861 = vld [vmem:[%s1854 + $0x18] sm:$0xf]
        %v1862 = vld [vmem:[%s1854 + $0x1c] sm:$0xf]
        %vm1863 = vsmask.f32 7424
        %v1865 = vshrl.u32 %v1844, 16
        %v1867 = vshll.u32 %v1844, 16
        %v1869 = vrot.slane %v1867, 1
        %v1870 = vor.u32 %v1865, %v1869
        %v1872 = vshll.u32 %v1845, 16
        %v1874 = vrot.slane %v1872, 1
        %v1875 = vsel %vm1863, %v1870, %v1874
        %v1876 = vshrl.u32 %v1845, 16
        %v1878 = vor.u32 %v1876, %v1874
        %v1887 = vunpack.c.l.b16 %v1855
        %v1888 = vunpack.c.l.b16 %v1856
        %v1889 = vunpack.c.l.b16 %v1857
        %v1890 = vunpack.c.l.b16 %v1858
        %v1891 = vunpack.c.l.b16 %v1859
        %v1892 = vunpack.c.l.b16 %v1860
        %v1893 = vunpack.c.l.b16 %v1861
        %v1894 = vunpack.c.l.b16 %v1862
        %v1895 = vpack.c.b16 %v1888, %v1887
        %v1896 = vpack.c.b16 %v1890, %v1889
        %v1897 = vpack.c.b16 %v1892, %v1891
        %v1898 = vpack.c.b16 %v1894, %v1893
        %v1904 = vsel %vm1551, %v1875, 0
        %v1907 = vsel %vm1551, %v1878, 0
        %1909 = vmatprep.subr.bf16.mxu0 0
        %1910 = vmatpush1.bf16.msra.mxu0 0
        %1911 = vmatprep.subr.bf16.mxu0 0
        %1912 = vmatpush1.bf16.msra.mxu0 0
        %1913 = vmatprep.subr.bf16.mxu0 0
        %1914 = vmatpush1.bf16.msra.mxu0 0
        %1915 = vmatprep.subr.bf16.mxu0 0
        %1916 = vmatpush1.bf16.msra.mxu0 0
        %1917 = vmatprep.subr.bf16.mxu0 0
        %1918 = vmatpush1.bf16.msra.mxu0 %v1898
        %1919 = vmatprep.subr.bf16.mxu0 0
        %1920 = vmatpush1.bf16.msra.mxu0 %v1897
        %1921 = vmatprep.subr.bf16.mxu0 0
        %1922 = vmatpush1.bf16.msra.mxu0 %v1896
        %1923 = vmatprep.subr.bf16.mxu0 0
        %1924 = vmatpush1.bf16.msra.mxu0 %v1895
        %1925 = vmatprep.subr.bf16.mxu0 0
        %1926 = vmatpush2.bf16.msra.mxu0 0
        %1927 = vmatprep.subr.bf16.mxu0 0
        %1928 = vmatpush2.bf16.msra.mxu0 0
        %1929 = vmatprep.subr.bf16.mxu0 0
        %1930 = vmatpush2.bf16.msra.mxu0 0
        %1931 = vmatprep.subr.bf16.mxu0 0
        %1932 = vmatpush2.bf16.msra.mxu0 0
        %1933 = vmatprep.subr.bf16.mxu0 0
        %1934 = vmatpush2.bf16.msra.mxu0 0
        %1935 = vmatprep.subr.bf16.mxu0 0
        %1936 = vmatpush2.bf16.msra.mxu0 0
        %1937 = vmatprep.subr.bf16.mxu0 0
        %1938 = vmatpush2.bf16.msra.mxu0 0
        %1939 = vmatprep.subr.bf16.mxu0 0
        %1940 = vmatpush2.bf16.msra.mxu0 0
        %1941 = vmatprep.mubr.bf16.mxu0 0
        %1942 = vmatmul.mubr.bf16.gmra.mxu0 %v1904
        %v1943 = vpop.f32.mrf.mxu0
        %v1944 = vadd.f32 0.0, %v1943
        %v1945 = vpop.f32.mrf.mxu0
        %v1946 = vpop.f32.mrf.mxu0
        %v1947 = vadd.f32 0.0, %v1946
        %v1948 = vpop.f32.mrf.mxu0
        %1949 = vmatprep.mubr.bf16.mxu0 0
        %1950 = vmatmul.mubr.bf16.gmra.mxu0 %v1907
        %v1951 = vpop.f32.mrf.mxu0
        %v1952 = vadd.f32 0.0, %v1951
        %v1953 = vpop.f32.mrf.mxu0
        %v1954 = vpop.f32.mrf.mxu0
        %v1955 = vpop.f32.mrf.mxu0
        %1956 = vdwg.mxu0
        %v1965 = vunpack.c.l.b16 %v1846
        %v1966 = vunpack.c.l.b16 %v1847
        %v1967 = vunpack.c.l.b16 %v1848
        %v1968 = vunpack.c.l.b16 %v1849
        %v1969 = vunpack.c.l.b16 %v1850
        %v1970 = vunpack.c.l.b16 %v1851
        %v1971 = vunpack.c.l.b16 %v1852
        %v1972 = vunpack.c.l.b16 %v1853
        %v1973 = vpack.c.b16 %v1966, %v1965
        %v1974 = vpack.c.b16 %v1968, %v1967
        %v1975 = vpack.c.b16 %v1970, %v1969
        %v1976 = vpack.c.b16 %v1972, %v1971
        %v1981 = vsel %vm1551, %v1844, 0
        %v1983 = vsel %vm1551, %v1845, 0
        %1985 = vmatprep.subr.bf16.mxu0 0
        %1986 = vmatpush1.bf16.msra.mxu0 0
        %1987 = vmatprep.subr.bf16.mxu0 0
        %1988 = vmatpush1.bf16.msra.mxu0 0
        %1989 = vmatprep.subr.bf16.mxu0 0
        %1990 = vmatpush1.bf16.msra.mxu0 0
        %1991 = vmatprep.subr.bf16.mxu0 0
        %1992 = vmatpush1.bf16.msra.mxu0 0
        %1993 = vmatprep.subr.bf16.mxu0 0
        %1994 = vmatpush1.bf16.msra.mxu0 %v1976
        %1995 = vmatprep.subr.bf16.mxu0 0
        %1996 = vmatpush1.bf16.msra.mxu0 %v1975
        %1997 = vmatprep.subr.bf16.mxu0 0
        %1998 = vmatpush1.bf16.msra.mxu0 %v1974
        %1999 = vmatprep.subr.bf16.mxu0 0
        %2000 = vmatpush1.bf16.msra.mxu0 %v1973
        %2001 = vmatprep.subr.bf16.mxu0 0
        %2002 = vmatpush2.bf16.msra.mxu0 0
        %2003 = vmatprep.subr.bf16.mxu0 0
        %2004 = vmatpush2.bf16.msra.mxu0 0
        %2005 = vmatprep.subr.bf16.mxu0 0
        %2006 = vmatpush2.bf16.msra.mxu0 0
        %2007 = vmatprep.subr.bf16.mxu0 0
        %2008 = vmatpush2.bf16.msra.mxu0 0
        %2009 = vmatprep.subr.bf16.mxu0 0
        %2010 = vmatpush2.bf16.msra.mxu0 0
        %2011 = vmatprep.subr.bf16.mxu0 0
        %2012 = vmatpush2.bf16.msra.mxu0 0
        %2013 = vmatprep.subr.bf16.mxu0 0
        %2014 = vmatpush2.bf16.msra.mxu0 0
        %2015 = vmatprep.subr.bf16.mxu0 0
        %2016 = vmatpush2.bf16.msra.mxu0 0
        %2017 = vmatprep.mubr.bf16.mxu0 0
        %2018 = vmatmul.mubr.bf16.gmra.mxu0 %v1981
        %v2019 = vpop.f32.mrf.mxu0
        %v2020 = vadd.f32 %v1944, %v2019
        %v2021 = vpop.f32.mrf.mxu0
        %v2022 = vpop.f32.mrf.mxu0
        %v2023 = vadd.f32 %v1947, %v2022
        %v2024 = vpop.f32.mrf.mxu0
        %2025 = vmatprep.mubr.bf16.mxu0 0
        %2026 = vmatmul.mubr.bf16.gmra.mxu0 %v1983
        %v2027 = vpop.f32.mrf.mxu0
        %v2028 = vadd.f32 %v1952, %v2027
        %v2029 = vpop.f32.mrf.mxu0
        %v2030 = vpop.f32.mrf.mxu0
        %v2031 = vpop.f32.mrf.mxu0
        %2032 = vdwg.mxu0
        %s2033 = scalar_lea.vmem %s13, 64
        %v2034 = vld [vmem:[%s2033] sm:$0xf]
        %v2035 = vld [vmem:[%s2033 + $0x4] sm:$0xf]
        %v2036 = vld [vmem:[%s2033 + $0x8] sm:$0xf]
        %v2037 = vld [vmem:[%s2033 + $0xc] sm:$0xf]
        %v2038 = vld [vmem:[%s2033 + $0x10] sm:$0xf]
        %v2039 = vld [vmem:[%s2033 + $0x14] sm:$0xf]
        %v2040 = vld [vmem:[%s2033 + $0x18] sm:$0xf]
        %v2041 = vld [vmem:[%s2033 + $0x1c] sm:$0xf]
        %vm2044 = vcmask 1046528
        %v2045 = vrot.slane %v1844, 1
        %v2046 = vrot.slane %v1845, 1
        %v2047 = vsel %vm2044, %v2045, %v2046
        %v2056 = vunpack.c.l.b16 %v2034
        %v2057 = vunpack.c.l.b16 %v2035
        %v2058 = vunpack.c.l.b16 %v2036
        %v2059 = vunpack.c.l.b16 %v2037
        %v2060 = vunpack.c.l.b16 %v2038
        %v2061 = vunpack.c.l.b16 %v2039
        %v2062 = vunpack.c.l.b16 %v2040
        %v2063 = vunpack.c.l.b16 %v2041
        %v2064 = vpack.c.b16 %v2057, %v2056
        %v2065 = vpack.c.b16 %v2059, %v2058
        %v2066 = vpack.c.b16 %v2061, %v2060
        %v2067 = vpack.c.b16 %v2063, %v2062
        %v2073 = vsel %vm1551, %v2047, 0
        %v2076 = vsel %vm1551, %v2046, 0
        %2078 = vmatprep.subr.bf16.mxu0 0
        %2079 = vmatpush1.bf16.msra.mxu0 0
        %2080 = vmatprep.subr.bf16.mxu0 0
        %2081 = vmatpush1.bf16.msra.mxu0 0
        %2082 = vmatprep.subr.bf16.mxu0 0
        %2083 = vmatpush1.bf16.msra.mxu0 0
        %2084 = vmatprep.subr.bf16.mxu0 0
        %2085 = vmatpush1.bf16.msra.mxu0 0
        %2086 = vmatprep.subr.bf16.mxu0 0
        %2087 = vmatpush1.bf16.msra.mxu0 %v2067
        %2088 = vmatprep.subr.bf16.mxu0 0
        %2089 = vmatpush1.bf16.msra.mxu0 %v2066
        %2090 = vmatprep.subr.bf16.mxu0 0
        %2091 = vmatpush1.bf16.msra.mxu0 %v2065
        %2092 = vmatprep.subr.bf16.mxu0 0
        %2093 = vmatpush1.bf16.msra.mxu0 %v2064
        %2094 = vmatprep.subr.bf16.mxu0 0
        %2095 = vmatpush2.bf16.msra.mxu0 0
        %2096 = vmatprep.subr.bf16.mxu0 0
        %2097 = vmatpush2.bf16.msra.mxu0 0
        %2098 = vmatprep.subr.bf16.mxu0 0
        %2099 = vmatpush2.bf16.msra.mxu0 0
        %2100 = vmatprep.subr.bf16.mxu0 0
        %2101 = vmatpush2.bf16.msra.mxu0 0
        %2102 = vmatprep.subr.bf16.mxu0 0
        %2103 = vmatpush2.bf16.msra.mxu0 0
        %2104 = vmatprep.subr.bf16.mxu0 0
        %2105 = vmatpush2.bf16.msra.mxu0 0
        %2106 = vmatprep.subr.bf16.mxu0 0
        %2107 = vmatpush2.bf16.msra.mxu0 0
        %2108 = vmatprep.subr.bf16.mxu0 0
        %2109 = vmatpush2.bf16.msra.mxu0 0
        %2110 = vmatprep.mubr.bf16.mxu0 0
        %2111 = vmatmul.mubr.bf16.gmra.mxu0 %v2073
        %v2112 = vpop.f32.mrf.mxu0
        %v2113 = vadd.f32 0.0, %v2112
        %v2114 = vpop.f32.mrf.mxu0
        %v2115 = vpop.f32.mrf.mxu0
        %v2116 = vadd.f32 0.0, %v2115
        %v2117 = vpop.f32.mrf.mxu0
        %2118 = vmatprep.mubr.bf16.mxu0 0
        %2119 = vmatmul.mubr.bf16.gmra.mxu0 %v2076
        %v2120 = vpop.f32.mrf.mxu0
        %v2121 = vadd.f32 0.0, %v2120
        %v2122 = vpop.f32.mrf.mxu0
        %v2123 = vpop.f32.mrf.mxu0
        %v2124 = vpop.f32.mrf.mxu0
        %2125 = vdwg.mxu0
        %v2126 = vadd.f32 %v2020, %v2113
        %v2127 = vadd.f32 %v2023, %v2116
        %v2128 = vadd.f32 %v2028, %v2121
        %v2130 = vsel %vm1354, %v1351, 0
        %v2133 = vsel %vm1354, %v1352, 0
        %v2136 = vsel %vm1354, %v1353, 0
        %v2139 = vsel %vm1361, %v1348, 0
        %2141 = vmatprep.subr.mxu0 0.0
        %2142 = vmatpush1.msra.mxu0 0.0
        %2143 = vmatprep.subr.mxu0 0.0
        %2144 = vmatpush1.msra.mxu0 0.0
        %2145 = vmatprep.subr.mxu0 0.0
        %2146 = vmatpush1.msra.mxu0 0.0
        %2147 = vmatprep.subr.mxu0 0.0
        %2148 = vmatpush1.msra.mxu0 0.0
        %2149 = vmatprep.subr.mxu0 0.0
        %2150 = vmatpush1.msra.mxu0 0.0
        %2151 = vmatprep.subr.mxu0 0.0
        %2152 = vmatpush1.msra.mxu0 0.0
        %2153 = vmatprep.subr.mxu0 0.0
        %2154 = vmatpush1.msra.mxu0 0.0
        %2155 = vmatprep.subr.mxu0 0.0
        %2156 = vmatpush1.msra.mxu0 0.0
        %2157 = vmatprep.subr.mxu0 0.0
        %2158 = vmatpush1.msra.mxu0 0.0
        %2159 = vmatprep.subr.mxu0 0.0
        %2160 = vmatpush1.msra.mxu0 0.0
        %2161 = vmatprep.subr.mxu0 0.0
        %2162 = vmatpush1.msra.mxu0 0.0
        %2163 = vmatprep.subr.mxu0 0.0
        %2164 = vmatpush1.msra.mxu0 0.0
        %2165 = vmatprep.subr.mxu0 0.0
        %2166 = vmatpush1.msra.mxu0 0.0
        %2167 = vmatprep.subr.mxu0 0.0
        %2168 = vmatpush1.msra.mxu0 0.0
        %2169 = vmatprep.subr.mxu0 0.0
        %2170 = vmatpush1.msra.mxu0 0.0
        %2171 = vmatprep.subr.mxu0 0.0
        %2172 = vmatpush1.msra.mxu0 %v2139
        %2173 = vmatprep.subr.mxu0 0.0
        %2174 = vmatpush2.msra.mxu0 0.0
        %2175 = vmatprep.subr.mxu0 0.0
        %2176 = vmatpush2.msra.mxu0 0.0
        %2177 = vmatprep.subr.mxu0 0.0
        %2178 = vmatpush2.msra.mxu0 0.0
        %2179 = vmatprep.subr.mxu0 0.0
        %2180 = vmatpush2.msra.mxu0 0.0
        %2181 = vmatprep.subr.mxu0 0.0
        %2182 = vmatpush2.msra.mxu0 0.0
        %2183 = vmatprep.subr.mxu0 0.0
        %2184 = vmatpush2.msra.mxu0 0.0
        %2185 = vmatprep.subr.mxu0 0.0
        %2186 = vmatpush2.msra.mxu0 0.0
        %2187 = vmatprep.subr.mxu0 0.0
        %2188 = vmatpush2.msra.mxu0 0.0
        %2189 = vmatprep.subr.mxu0 0.0
        %2190 = vmatpush2.msra.mxu0 0.0
        %2191 = vmatprep.subr.mxu0 0.0
        %2192 = vmatpush2.msra.mxu0 0.0
        %2193 = vmatprep.subr.mxu0 0.0
        %2194 = vmatpush2.msra.mxu0 0.0
        %2195 = vmatprep.subr.mxu0 0.0
        %2196 = vmatpush2.msra.mxu0 0.0
        %2197 = vmatprep.subr.mxu0 0.0
        %2198 = vmatpush2.msra.mxu0 0.0
        %2199 = vmatprep.subr.mxu0 0.0
        %2200 = vmatpush2.msra.mxu0 0.0
        %2201 = vmatprep.subr.mxu0 0.0
        %2202 = vmatpush2.msra.mxu0 0.0
        %2203 = vmatprep.subr.mxu0 0.0
        %2204 = vmatpush2.msra.mxu0 0.0
        %2205 = vmatprep.mubr.f32.mxu0 0.0
        %2206 = vmatmul.mubr.f32.gmra.mxu0 %v2130
        %v2207 = vpop.f32.mrf.mxu0
        %v2208 = vadd.f32 0.0, %v2207
        %v2209 = vpop.f32.mrf.mxu0
        %2210 = vmatprep.mubr.f32.mxu0 0.0
        %2211 = vmatmul.mubr.f32.gmra.mxu0 %v2133
        %v2212 = vpop.f32.mrf.mxu0
        %v2213 = vadd.f32 0.0, %v2212
        %v2214 = vpop.f32.mrf.mxu0
        %2215 = vmatprep.mubr.f32.mxu0 0.0
        %2216 = vmatmul.mubr.f32.gmra.mxu0 %v2136
        %v2217 = vpop.f32.mrf.mxu0
        %v2218 = vadd.f32 0.0, %v2217
        %v2219 = vpop.f32.mrf.mxu0
        %2220 = vdwg.mxu0
        %v2221 = vmul.f32 %v2126, %v2208
        %v2222 = vmul.f32 %v2127, %v2213
        %v2223 = vmul.f32 %v2128, %v2218
        %v2224 = vld [vmem:[%s10] sm:$0x1]
        %v2226 = vlaneseq
        %v2227 = vshrl.u32 %v2226, 7
        %v2228 = vsub.s32 0, %v2227
        %v2229 = vrot.slane %v2224, %v2228
        %v2231 = vadd.f32 %v2221, %v2229
        %v2232 = vadd.f32 %v2222, %v2229
        %v2233 = vadd.f32 %v2223, %v2229
        %vm2234 = vcmp.ge.f32.partialorder %v2231, 0.0
        %vm2235 = vcmp.ge.f32.partialorder %v2232, 0.0
        %vm2236 = vcmp.ge.f32.partialorder %v2233, 0.0
        %v2237 = vmul.f32 %v2231, 0.2
        %v2238 = vmul.f32 %v2232, 0.2
        %v2239 = vmul.f32 %v2233, 0.2
        %v2240 = vsel %vm2234, %v2231, %v2237
        %v2241 = vsel %vm2235, %v2232, %v2238
        %v2242 = vsel %vm2236, %v2233, %v2239
        %v2243 = vmul.f32 %v2240, 1.4142135
        %v2244 = vmul.f32 %v2241, 1.4142135
        %v2245 = vmul.f32 %v2242, 1.4142135
        %v2247 = vsel %vm1361, %v1121, 0
        %2249 = vmatprep.subr.mxu0 0.0
        %2250 = vmatpush1.msra.mxu0 0.0
        %2251 = vmatprep.subr.mxu0 0.0
        %2252 = vmatpush1.msra.mxu0 0.0
        %2253 = vmatprep.subr.mxu0 0.0
        %2254 = vmatpush1.msra.mxu0 0.0
        %2255 = vmatprep.subr.mxu0 0.0
        %2256 = vmatpush1.msra.mxu0 0.0
        %2257 = vmatprep.subr.mxu0 0.0
        %2258 = vmatpush1.msra.mxu0 0.0
        %2259 = vmatprep.subr.mxu0 0.0
        %2260 = vmatpush1.msra.mxu0 0.0
        %2261 = vmatprep.subr.mxu0 0.0
        %2262 = vmatpush1.msra.mxu0 0.0
        %2263 = vmatprep.subr.mxu0 0.0
        %2264 = vmatpush1.msra.mxu0 0.0
        %2265 = vmatprep.subr.mxu0 0.0
        %2266 = vmatpush1.msra.mxu0 0.0
        %2267 = vmatprep.subr.mxu0 0.0
        %2268 = vmatpush1.msra.mxu0 0.0
        %2269 = vmatprep.subr.mxu0 0.0
        %2270 = vmatpush1.msra.mxu0 0.0
        %2271 = vmatprep.subr.mxu0 0.0
        %2272 = vmatpush1.msra.mxu0 0.0
        %2273 = vmatprep.subr.mxu0 0.0
        %2274 = vmatpush1.msra.mxu0 0.0
        %2275 = vmatprep.subr.mxu0 0.0
        %2276 = vmatpush1.msra.mxu0 0.0
        %2277 = vmatprep.subr.mxu0 0.0
        %2278 = vmatpush1.msra.mxu0 0.0
        %2279 = vmatprep.subr.mxu0 0.0
        %2280 = vmatpush1.msra.mxu0 %v2247
        %2281 = vmatprep.subr.mxu0 0.0
        %2282 = vmatpush2.msra.mxu0 0.0
        %2283 = vmatprep.subr.mxu0 0.0
        %2284 = vmatpush2.msra.mxu0 0.0
        %2285 = vmatprep.subr.mxu0 0.0
        %2286 = vmatpush2.msra.mxu0 0.0
        %2287 = vmatprep.subr.mxu0 0.0
        %2288 = vmatpush2.msra.mxu0 0.0
        %2289 = vmatprep.subr.mxu0 0.0
        %2290 = vmatpush2.msra.mxu0 0.0
        %2291 = vmatprep.subr.mxu0 0.0
        %2292 = vmatpush2.msra.mxu0 0.0
        %2293 = vmatprep.subr.mxu0 0.0
        %2294 = vmatpush2.msra.mxu0 0.0
        %2295 = vmatprep.subr.mxu0 0.0
        %2296 = vmatpush2.msra.mxu0 0.0
        %2297 = vmatprep.subr.mxu0 0.0
        %2298 = vmatpush2.msra.mxu0 0.0
        %2299 = vmatprep.subr.mxu0 0.0
        %2300 = vmatpush2.msra.mxu0 0.0
        %2301 = vmatprep.subr.mxu0 0.0
        %2302 = vmatpush2.msra.mxu0 0.0
        %2303 = vmatprep.subr.mxu0 0.0
        %2304 = vmatpush2.msra.mxu0 0.0
        %2305 = vmatprep.subr.mxu0 0.0
        %2306 = vmatpush2.msra.mxu0 0.0
        %2307 = vmatprep.subr.mxu0 0.0
        %2308 = vmatpush2.msra.mxu0 0.0
        %2309 = vmatprep.subr.mxu0 0.0
        %2310 = vmatpush2.msra.mxu0 0.0
        %2311 = vmatprep.subr.mxu0 0.0
        %2312 = vmatpush2.msra.mxu0 0.0
        %2313 = vmatprep.mubr.f32.mxu0 0.0
        %2314 = vmatmul.mubr.f32.gmra.mxu0 %v2130
        %v2315 = vpop.f32.mrf.mxu0
        %v2316 = vadd.f32 0.0, %v2315
        %v2317 = vpop.f32.mrf.mxu0
        %2318 = vmatprep.mubr.f32.mxu0 0.0
        %2319 = vmatmul.mubr.f32.gmra.mxu0 %v2133
        %v2320 = vpop.f32.mrf.mxu0
        %v2321 = vadd.f32 0.0, %v2320
        %v2322 = vpop.f32.mrf.mxu0
        %2323 = vmatprep.mubr.f32.mxu0 0.0
        %2324 = vmatmul.mubr.f32.gmra.mxu0 %v2136
        %v2325 = vpop.f32.mrf.mxu0
        %v2326 = vadd.f32 0.0, %v2325
        %v2327 = vpop.f32.mrf.mxu0
        %2328 = vdwg.mxu0
        %v2329 = vld [vmem:[%s19] sm:$0xff]
        %v2330 = vld [vmem:[%s19 + $0x8] sm:$0xff]
        %v2331 = vmul.f32 %v2243, %v2316
        %v2332 = vmul.f32 %v2244, %v2321
        %v2333 = vmul.f32 %v2245, %v2326
        %vm2334 = vcmask 146432
        %v2336 = vsel %vm2334, %v2329, 0
        %v2339 = vsel %vm2334, %v2330, 0
        %v2342 = vsel %vm1361, %v2333, 0
        %2344 = vmatprep.subr.mxu0 0.0
        %2345 = vmatpush1.msra.mxu0 0.0
        %2346 = vmatprep.subr.mxu0 0.0
        %2347 = vmatpush1.msra.mxu0 0.0
        %2348 = vmatprep.subr.mxu0 0.0
        %2349 = vmatpush1.msra.mxu0 0.0
        %2350 = vmatprep.subr.mxu0 0.0
        %2351 = vmatpush1.msra.mxu0 0.0
        %2352 = vmatprep.subr.mxu0 0.0
        %2353 = vmatpush1.msra.mxu0 0.0
        %2354 = vmatprep.subr.mxu0 0.0
        %2355 = vmatpush1.msra.mxu0 0.0
        %2356 = vmatprep.subr.mxu0 0.0
        %2357 = vmatpush1.msra.mxu0 0.0
        %2358 = vmatprep.subr.mxu0 0.0
        %2359 = vmatpush1.msra.mxu0 0.0
        %2360 = vmatprep.subr.mxu0 0.0
        %2361 = vmatpush1.msra.mxu0 0.0
        %2362 = vmatprep.subr.mxu0 0.0
        %2363 = vmatpush1.msra.mxu0 0.0
        %2364 = vmatprep.subr.mxu0 0.0
        %2365 = vmatpush1.msra.mxu0 0.0
        %2366 = vmatprep.subr.mxu0 0.0
        %2367 = vmatpush1.msra.mxu0 0.0
        %2368 = vmatprep.subr.mxu0 0.0
        %2369 = vmatpush1.msra.mxu0 0.0
        %2370 = vmatprep.subr.mxu0 0.0
        %2371 = vmatpush1.msra.mxu0 %v2342
        %2372 = vmatprep.subr.mxu0 0.0
        %2373 = vmatpush1.msra.mxu0 %v2332
        %2374 = vmatprep.subr.mxu0 0.0
        %2375 = vmatpush1.msra.mxu0 %v2331
        %2376 = vmatprep.subr.mxu0 0.0
        %2377 = vmatpush2.msra.mxu0 0.0
        %2378 = vmatprep.subr.mxu0 0.0
        %2379 = vmatpush2.msra.mxu0 0.0
        %2380 = vmatprep.subr.mxu0 0.0
        %2381 = vmatpush2.msra.mxu0 0.0
        %2382 = vmatprep.subr.mxu0 0.0
        %2383 = vmatpush2.msra.mxu0 0.0
        %2384 = vmatprep.subr.mxu0 0.0
        %2385 = vmatpush2.msra.mxu0 0.0
        %2386 = vmatprep.subr.mxu0 0.0
        %2387 = vmatpush2.msra.mxu0 0.0
        %2388 = vmatprep.subr.mxu0 0.0
        %2389 = vmatpush2.msra.mxu0 0.0
        %2390 = vmatprep.subr.mxu0 0.0
        %2391 = vmatpush2.msra.mxu0 0.0
        %2392 = vmatprep.subr.mxu0 0.0
        %2393 = vmatpush2.msra.mxu0 0.0
        %2394 = vmatprep.subr.mxu0 0.0
        %2395 = vmatpush2.msra.mxu0 0.0
        %2396 = vmatprep.subr.mxu0 0.0
        %2397 = vmatpush2.msra.mxu0 0.0
        %2398 = vmatprep.subr.mxu0 0.0
        %2399 = vmatpush2.msra.mxu0 0.0
        %2400 = vmatprep.subr.mxu0 0.0
        %2401 = vmatpush2.msra.mxu0 0.0
        %2402 = vmatprep.subr.mxu0 0.0
        %2403 = vmatpush2.msra.mxu0 0.0
        %2404 = vmatprep.subr.mxu0 0.0
        %2405 = vmatpush2.msra.mxu0 0.0
        %2406 = vmatprep.subr.mxu0 0.0
        %2407 = vmatpush2.msra.mxu0 0.0
        %2408 = vmatprep.mubr.f32.mxu0 0.0
        %2409 = vmatmul.mubr.f32.gmra.mxu0 %v2336
        %v2410 = vpop.f32.mrf.mxu0
        %v2411 = vadd.f32 0.0, %v2410
        %v2412 = vpop.f32.mrf.mxu0
        %2413 = vmatprep.mubr.f32.mxu0 0.0
        %2414 = vmatmul.mubr.f32.gmra.mxu0 %v2339
        %v2415 = vpop.f32.mrf.mxu0
        %v2416 = vadd.f32 0.0, %v2415
        %v2417 = vpop.f32.mrf.mxu0
        %2418 = vdwg.mxu0
        %v2419 = vpack.c.bf16 %v2416, %v2411
        %v2420 = vld [vmem:[%s14] sm:$0xf]
        %v2421 = vld [vmem:[%s14 + $0x4] sm:$0xf]
        %v2422 = vld [vmem:[%s14 + $0x8] sm:$0xf]
        %v2423 = vld [vmem:[%s14 + $0xc] sm:$0xf]
        %v2424 = vld [vmem:[%s14 + $0x10] sm:$0xf]
        %v2425 = vld [vmem:[%s14 + $0x14] sm:$0xf]
        %v2426 = vld [vmem:[%s14 + $0x18] sm:$0xf]
        %v2427 = vld [vmem:[%s14 + $0x1c] sm:$0xf]
        %v2428 = vld [vmem:[%s14 + $0x20] sm:$0xf]
        %v2429 = vld [vmem:[%s14 + $0x24] sm:$0xf]
        %v2430 = vld [vmem:[%s14 + $0x28] sm:$0xf]
        %v2431 = vld [vmem:[%s14 + $0x2c] sm:$0xf]
        %v2432 = vld [vmem:[%s14 + $0x30] sm:$0xf]
        %v2433 = vld [vmem:[%s14 + $0x34] sm:$0xf]
        %v2434 = vld [vmem:[%s14 + $0x38] sm:$0xf]
        %v2435 = vld [vmem:[%s14 + $0x3c] sm:$0xf]
        %v2436 = vld [vmem:[%s15] sm:$0x1]
        %v2438 = vlaneseq
        %v2439 = vshrl.u32 %v2438, 7
        %v2440 = vsub.s32 0, %v2439
        %v2441 = vrot.slane %v2436, %v2440
        %v2459 = vunpack.c.l.b16 %v2420
        %v2460 = vunpack.c.l.b16 %v2421
        %v2461 = vunpack.c.l.b16 %v2422
        %v2462 = vunpack.c.l.b16 %v2423
        %v2463 = vunpack.c.l.b16 %v2424
        %v2464 = vunpack.c.l.b16 %v2425
        %v2465 = vunpack.c.l.b16 %v2426
        %v2466 = vunpack.c.l.b16 %v2427
        %v2467 = vunpack.c.l.b16 %v2428
        %v2468 = vunpack.c.l.b16 %v2429
        %v2469 = vunpack.c.l.b16 %v2430
        %v2470 = vunpack.c.l.b16 %v2431
        %v2471 = vunpack.c.l.b16 %v2432
        %v2472 = vunpack.c.l.b16 %v2433
        %v2473 = vunpack.c.l.b16 %v2434
        %v2474 = vunpack.c.l.b16 %v2435
        %v2475 = vpack.c.b16 %v2460, %v2459
        %v2476 = vpack.c.b16 %v2462, %v2461
        %v2477 = vpack.c.b16 %v2464, %v2463
        %v2478 = vpack.c.b16 %v2466, %v2465
        %v2479 = vpack.c.b16 %v2468, %v2467
        %v2480 = vpack.c.b16 %v2470, %v2469
        %v2481 = vpack.c.b16 %v2472, %v2471
        %v2482 = vpack.c.b16 %v2474, %v2473
        %2491 = vmatprep.subr.bf16.mxu0 0
        %2492 = vmatpush1.bf16.msra.mxu0 %v2482
        %2493 = vmatprep.subr.bf16.mxu0 0
        %2494 = vmatpush1.bf16.msra.mxu0 %v2481
        %2495 = vmatprep.subr.bf16.mxu0 0
        %2496 = vmatpush1.bf16.msra.mxu0 %v2480
        %2497 = vmatprep.subr.bf16.mxu0 0
        %2498 = vmatpush1.bf16.msra.mxu0 %v2479
        %2499 = vmatprep.subr.bf16.mxu0 0
        %2500 = vmatpush1.bf16.msra.mxu0 %v2478
        %2501 = vmatprep.subr.bf16.mxu0 0
        %2502 = vmatpush1.bf16.msra.mxu0 %v2477
        %2503 = vmatprep.subr.bf16.mxu0 0
        %2504 = vmatpush1.bf16.msra.mxu0 %v2476
        %2505 = vmatprep.subr.bf16.mxu0 0
        %2506 = vmatpush1.bf16.msra.mxu0 %v2475
        %2507 = vmatprep.subr.bf16.mxu0 0
        %2508 = vmatpush2.bf16.msra.mxu0 0
        %2509 = vmatprep.subr.bf16.mxu0 0
        %2510 = vmatpush2.bf16.msra.mxu0 0
        %2511 = vmatprep.subr.bf16.mxu0 0
        %2512 = vmatpush2.bf16.msra.mxu0 0
        %2513 = vmatprep.subr.bf16.mxu0 0
        %2514 = vmatpush2.bf16.msra.mxu0 0
        %2515 = vmatprep.subr.bf16.mxu0 0
        %2516 = vmatpush2.bf16.msra.mxu0 0
        %2517 = vmatprep.subr.bf16.mxu0 0
        %2518 = vmatpush2.bf16.msra.mxu0 0
        %2519 = vmatprep.subr.bf16.mxu0 0
        %2520 = vmatpush2.bf16.msra.mxu0 0
        %2521 = vmatprep.subr.bf16.mxu0 0
        %2522 = vmatpush2.bf16.msra.mxu0 0
        %2523 = vmatprep.mubr.bf16.mxu0 0
        %2524 = vmatmul.mubr.bf16.gmra.mxu0 %v2419
        %v2525 = vpop.f32.mrf.mxu0
        %v2526 = vadd.f32 %v2441, %v2525
        %v2527 = vpop.f32.mrf.mxu0
        %v2528 = vpop.f32.mrf.mxu0
        %v2529 = vadd.f32 %v2441, %v2528
        %v2530 = vpop.f32.mrf.mxu0
        %2531 = vdwg.mxu0
        %vm2532 = vcmask 195584
        %2533 = vst.msk [vmem:[%s731] sm:$0xff] %vm2532, %v2526
        %2534 = vst.msk [vmem:[%s731 + $0x8] sm:$0xff] %vm2532, %v2529
        %s2535 = smul.u32 2, %s37
        %p2536 = scmp.lt.s32.totalorder %s2535, 3
        %s2537 = scalar_select %p2536, %s2535, 3
        %s2538 = smul.addr %s2537, 8
        %s2539 = scalar_lea.vmem %s20, %s2538
        // Predicated region
        $region129: #{_lambda_.1} parent=99 // pred_check
          %p2540 = pneg %p480
        $region130: #{_lambda_.1} parent=99 // pred_check_branch
          %2542 = sbr.rel (%p2540) target = $region132
        $region131: #{_lambda_.1} parent=99 // pred_region
          %s2543 = smul.u32 2, %s37
        $region132: #{_lambda_.1} parent=99 // pred_fallthru
          _
      $region100: #{_lambda_.1} parent=5 // pred_fallthru
        _
      %p2544 = scmp.le.s32.totalorder 2, %s32
      // Predicated region
      $region133: #{_lambda_.1} parent=5 // pred_check
        %p2545 = pneg %p2544
      $region134: #{_lambda_.1} parent=5 // pred_check_branch
        %2547 = sbr.rel (%p2545) target = $region136
      $region135: #{_lambda_.1} parent=5 // pred_region
        %s2548 = ssub.s32 %s32, 2
        // Predicated region
        $region137: #{_lambda_.1} parent=135 // pred_check
          %p2549 = pneg %p486
        $region138: #{_lambda_.1} parent=135 // pred_check_branch
          %2551 = sbr.rel (%p2549) target = $region140
        $region139: #{_lambda_.1} parent=135 // pred_region
          %s2552 = smul.u32 2, %s38
          %p2553 = scmp.lt.s32.totalorder %s2552, 3
          %s2554 = scalar_select %p2553, %s2552, 3
          %s2555 = smul.addr %s2554, 8
          %s2556 = scalar_lea.vmem %s20, %s2555
        $region140: #{_lambda_.1} parent=135 // pred_fallthru
          _
      $region136: #{_lambda_.1} parent=5 // pred_fallthru
        _
    $region6: #{_lambda_.1} parent=1 // loop_footer
      %s36 = sadd.s32 1, %s32
    $region7: #{_lambda_.1} parent=1 // loop_footer_branch
      %31 = sbr.rel target = $region3
    $region8: #{_lambda_.1} parent=1 // loop_exit
      _
    %2557 = vsyncpa [#allocation3], 1
    %s2558 = scalar_lea.sflag [#allocation3], 1
    %2559 = vsyncpa %s2558, 1
    %2560 = vsyncpa [#allocation5], 1
    %2561 = vsyncpa [#allocation8], 1
    %2562 = vsyncpa [#allocation11], 1

</llo_original>
